<compile_context>
chip_gen: v7x
topology: tpu7x:2x2x1
jax: 0.10.0
libtpu: 0.0.40
codegen_flags: <defaults>
</compile_context>

<pallas_src>
import functools

import jax
import jax.numpy as jnp
from jax.experimental import pallas as pl
from jax.experimental.pallas import tpu as pltpu

_LANE = 128
_SUBLANE = {4: 8, 2: 16, 1: 32}


def _partial_conv_kernel(x_ref, w_ref, b_ref, o_ref, patch_ref, *,
                         KH, KW, stride, TH, W_out):
    """One (image, output-row-tile) grid step.

    x_ref     : (Hp, Wp, C_in)    bf16  padded NHWC image (resident across h tiles)
    w_ref     : (C8, K)           bf16  weights, K = KH*KW*C_in, rows padded to 8
    b_ref     : (C8, 1)           f32   bias column (pad rows are zero)
    o_ref     : (C_out, M_tile)   f32   channel-major output tile, M lane-dense
    patch_ref : (M_tile, K)       bf16  VMEM im2col scratch (never touches HBM)
    """
    h = pl.program_id(1)
    row0 = h * TH * stride
    C_in = x_ref.shape[-1]
    M = TH * W_out

    # ---- im2col into VMEM: KH*KW shifted-window copies -----------------------
    for kh in range(KH):
        rows = (pl.ds(row0 + kh, TH) if stride == 1
                else pl.ds(row0 + kh, TH, stride))
        slab = x_ref[rows, :, :]                                  # (TH, Wp, C_in)
        for kw in range(KW):
            if stride == 1:
                win = slab[:, kw:kw + W_out, :]
            else:
                # TODO(synk): a space-to-depth prefold in the wrapper would make
                # the stride>1 path contiguous; unexercised for this proxy.
                win = slab[:, kw:kw + (W_out - 1) * stride + 1:stride, :]
            tap = kh * KW + kw
            patch_ref[:, tap * C_in:(tap + 1) * C_in] = win.reshape(M, C_in)

    # ---- single MXU dot with the folded contraction dim, f32 accumulation ----
    # (C8, K) x (M, K)^T -> (C8, M): output rows ride the (lane-dense) M axis.
    acc = jax.lax.dot_general(
        w_ref[...], patch_ref[...],
        dimension_numbers=(((1,), (1,)), ((), ())),
        preferred_element_type=jnp.float32)
    acc = acc + b_ref[...]                                        # bias over lanes
    o_ref[...] = acc[:o_ref.shape[0], :].astype(o_ref.dtype)


def _padded_vmem_bytes(shape, itemsize):
    """VMEM bytes of one buffer after Mosaic lane/sublane layout padding."""
    shape = (1, 1) + tuple(shape)
    sub = _SUBLANE.get(itemsize, 8)
    lanes = -(-shape[-1] // _LANE) * _LANE
    subl = -(-shape[-2] // sub) * sub
    outer = 1
    for d in shape[:-2]:
        outer *= d
    return outer * subl * lanes * itemsize


def _pick_row_tile(H_out, W_out, target_rows=256):
    """Output-row tile TH: TH | H_out, TH*W_out a multiple of 128 (lane-dense,
    unmasked stores), small tile, and preferably >= 2 h-tiles for v7x megacore."""
    divisors = [d for d in range(1, H_out + 1) if H_out % d == 0]
    lane_ok = [d for d in divisors if (d * W_out) % _LANE == 0]
    if lane_ok:
        small = [d for d in lane_ok if d * W_out <= target_rows and H_out // d >= 2]
        if small:
            return max(small)
        return min(lane_ok)
    # TODO(synk): odd W_out has no 128-aligned row tile; fall back to the full
    # plane (full-extent blocks are always legal) -- fine at proxy-sized inputs.
    return H_out


def partial_conv2d(x, weight, bias, *, stride=1, padding=1):
    """Conv2d forward (NCHW in / NCHW out) for the partial (channel-sliced)
    weight/bias that this proxy's remote worker would compute."""
    N, C_in, H, W = x.shape
    C_out, C_in_w, KH, KW = weight.shape
    assert C_in == C_in_w, (C_in, C_in_w)
    H_out = (H + 2 * padding - KH) // stride + 1
    W_out = (W + 2 * padding - KW) // stride + 1
    Hp, Wp = H + 2 * padding, W + 2 * padding
    K = KH * KW * C_in
    C8 = ((C_out + 7) // 8) * 8          # pad MXU LHS rows to a full sublane tile

    # ---- layout plumbing (single pass over the input; no HBM im2col) ---------
    # NHWC so C_in rides the lane dim; bf16 operands feed the MXU, accumulation
    # stays f32 inside the kernel.
    # TODO(synk): for C_in << 128 a W-into-channel fold would raise lane
    # occupancy of the resident image block; unnecessary at proxy-sized inputs.
    x_nhwc = jnp.transpose(x, (0, 2, 3, 1)).astype(jnp.bfloat16)
    x_pad = jnp.pad(x_nhwc, ((0, 0), (padding, padding), (padding, padding), (0, 0)))

    # Weights as (C8, K) with k = (kh*KW + kw)*C_in + ci, matching the kernel's
    # im2col patch layout; pad rows are zero and never reach the real output.
    w_ck = jnp.transpose(weight, (0, 2, 3, 1)).reshape(C_out, K)
    w_ck = jnp.pad(w_ck, ((0, C8 - C_out), (0, 0))).astype(jnp.bfloat16)
    b_col = jnp.pad(bias.astype(jnp.float32), (0, C8 - C_out)).reshape(C8, 1)

    TH = _pick_row_tile(H_out, W_out)
    n_h = H_out // TH
    M_tile = TH * W_out

    kernel = functools.partial(_partial_conv_kernel,
                               KH=KH, KW=KW, stride=stride, TH=TH, W_out=W_out)

    # VMEM budget with real padded layouts: double-buffered pipeline operands,
    # single-buffered im2col scratch, capped at 3/4 of this chip's physical VMEM
    # (-> ~48 MiB on v7x, up to ~96 MiB on v5e/v6e).
    step_bytes = (2 * _padded_vmem_bytes((Hp, Wp, C_in), 2)        # x block
                  + 2 * _padded_vmem_bytes((C8, K), 2)             # weights
                  + 2 * _padded_vmem_bytes((C8, 1), 4)             # bias
                  + 2 * _padded_vmem_bytes((C_out, M_tile), 4)     # output tile
                  + _padded_vmem_bytes((M_tile, K), 2))            # patch scratch
    try:
        vmem_cap = int(pltpu.get_tpu_info().vmem_capacity_bytes)
    except Exception:  # pragma: no cover - older jax without get_tpu_info
        vmem_cap = 64 * 2 ** 20
    vmem_limit = int(min(3 * vmem_cap // 4, max(32 * 2 ** 20, 4 * step_bytes)))

    # TODO(synk): very large images would need an H-tiled (halo) x block instead
    # of a resident padded image; not required at the sizes this proxy handles.
    out_flat = pl.pallas_call(
        kernel,
        out_shape=jax.ShapeDtypeStruct((N, C_out, H_out * W_out), jnp.float32),
        grid=(N, n_h),
        in_specs=[
            pl.BlockSpec((None, Hp, Wp, C_in), lambda n, h: (n, 0, 0, 0)),
            pl.BlockSpec((C8, K), lambda n, h: (0, 0)),
            pl.BlockSpec((C8, 1), lambda n, h: (0, 0)),
        ],
        out_specs=pl.BlockSpec((None, C_out, M_tile), lambda n, h: (n, 0, h)),
        scratch_shapes=[pltpu.VMEM((M_tile, K), jnp.bfloat16)],
        compiler_params=pltpu.CompilerParams(
            dimension_semantics=("parallel", "parallel"),
            vmem_limit_bytes=vmem_limit),
    )(x_pad, w_ck, b_col)

    # (N, C_out, H_out*W_out) is already channel-major NCHW -- a free reshape,
    # no slice / transpose pass over the output.
    return out_flat.reshape(N, C_out, H_out, W_out).astype(x.dtype)


class PartialConv2dProxyPallas:
    """Pallas stand-in for PartialConv2dProxy: runs the proxied partial conv locally.

    The original Conv2d's output channels are split into `num_parts` equal slices;
    `part_index` selects the slice this proxy computes (what the remote WorkerNode
    would run).
    """
    # TODO(synk): WorkerNode RPC and RuntimeRecord timing bookkeeping are pure
    # host-side networking/timing with no Pallas equivalent; only the proxied
    # partial-conv compute is reproduced here.

    def __init__(self, full_weight, full_bias, part_index, num_parts,
                 stride=1, padding=1):
        full_out = full_weight.shape[0]
        part = full_out // num_parts
        lo, hi = part_index * part, (part_index + 1) * part
        self.weight = full_weight[lo:hi]
        self.bias = full_bias[lo:hi]
        self.stride = stride
        self.padding = padding

    def __call__(self, x):
        return partial_conv2d(x, self.weight, self.bias,
                              stride=self.stride, padding=self.padding)


if __name__ == "__main__":
    key = jax.random.PRNGKey(0)
    k_x, k_w, k_b = jax.random.split(key, 3)

    # Original conv: Conv2d(4 -> 8, 3x3, stride 1, padding 1), split into 2 parts;
    # this proxy handles part_index = 0 (4 output channels).
    N, C_in, H, W = 2, 4, 16, 16
    FULL_OUT, KH, KW = 8, 3, 3
    NUM_PARTS, PART_INDEX = 2, 0

    x = jax.random.normal(k_x, (N, C_in, H, W), dtype=jnp.float32)
    fan_in = C_in * KH * KW
    full_weight = jax.random.normal(k_w, (FULL_OUT, C_in, KH, KW),
                                    dtype=jnp.float32) / jnp.sqrt(fan_in)
    full_bias = jax.random.normal(k_b, (FULL_OUT,), dtype=jnp.float32) * 0.1

    proxy = PartialConv2dProxyPallas(full_weight, full_bias,
                                     part_index=PART_INDEX, num_parts=NUM_PARTS,
                                     stride=1, padding=1)
    out = jax.block_until_ready(proxy(x))

    # Reference: same bf16 operand quantization, f32 accumulation (lax conv).
    ref = jax.lax.conv_general_dilated(
        x.astype(jnp.bfloat16), proxy.weight.astype(jnp.bfloat16),
        window_strides=(1, 1), padding=((1, 1), (1, 1)),
        dimension_numbers=("NCHW", "OIHW", "NCHW"),
        preferred_element_type=jnp.float32,
    ) + proxy.bias.reshape(1, -1, 1, 1)

    assert out.shape == (N, FULL_OUT // NUM_PARTS, H, W), out.shape
    max_err = float(jnp.max(jnp.abs(out - ref)))
    assert jnp.allclose(out, ref, atol=2e-3, rtol=2e-3), max_err

    print("KERNEL_OK")
</pallas_src>

<mosaic_0001>
module attributes {stable_mosaic.version = 11 : i64} {
  func.func @_partial_conv_kernel(%arg0: i32, %arg1: i32, %arg2: memref<1x18x18x4xbf16, #tpu.memory_space<vmem>>, %arg3: memref<8x36xbf16, #tpu.memory_space<vmem>>, %arg4: memref<8x1xf32, #tpu.memory_space<vmem>>, %arg5: memref<1x4x128xf32, #tpu.memory_space<vmem>>, %arg6: memref<128x36xbf16, #tpu.memory_space<vmem>>) attributes {dimension_semantics = [#tpu.dimension_semantics<parallel>, #tpu.dimension_semantics<parallel>], iteration_bounds = array<i64: 2, 2>, scalar_prefetch = 0 : i64, scratch_operands = 1 : i64, tpu.core_type = #tpu.core_type<tc>, window_params = [{transform_indices = @transform_0, window_bounds = array<i64: 1, 18, 18, 4>}, {pipeline_mode = #tpu.pipeline_mode<synchronous>, transform_indices = @transform_1, window_bounds = array<i64: 8, 36>}, {pipeline_mode = #tpu.pipeline_mode<synchronous>, transform_indices = @transform_2, window_bounds = array<i64: 8, 1>}, {transform_indices = @transform_3, window_bounds = array<i64: 1, 4, 128>}]} {
    %c8_i32 = arith.constant 8 : i32
    %0 = arith.muli %arg1, %c8_i32 : i32
    %c1_i32 = arith.constant 1 : i32
    %1 = arith.muli %0, %c1_i32 : i32
    %c0_i32 = arith.constant 0 : i32
    %2 = arith.addi %1, %c0_i32 : i32
    %c0 = arith.constant 0 : index
    %3 = arith.index_cast %2 : i32 to index
    %c0_0 = arith.constant 0 : index
    %c0_1 = arith.constant 0 : index
    %4 = vector.load %arg2[%c0, %3, %c0_0, %c0_1] : memref<1x18x18x4xbf16, #tpu.memory_space<vmem>>, vector<1x8x18x4xbf16>
    %5 = vector.shape_cast %4 : vector<1x8x18x4xbf16> to vector<8x18x4xbf16>
    %6 = vector.extract_strided_slice %5 {offsets = [0, 0, 0], sizes = [8, 16, 4], strides = [1, 1, 1]} : vector<8x18x4xbf16> to vector<8x16x4xbf16>
    %7 = vector.shape_cast %6 : vector<8x16x4xbf16> to vector<128x4xbf16>
    %c0_2 = arith.constant 0 : index
    %c0_3 = arith.constant 0 : index
    %8 = vector.load %arg6[%c0_2, %c0_3] : memref<128x36xbf16, #tpu.memory_space<vmem>>, vector<128x4xbf16>
    tpu.vector_store %arg6[%c0_2, %c0_3], %7 {strides = array<i32>} : memref<128x36xbf16, #tpu.memory_space<vmem>>, vector<128x4xbf16>,
    %9 = vector.extract_strided_slice %5 {offsets = [0, 1, 0], sizes = [8, 16, 4], strides = [1, 1, 1]} : vector<8x18x4xbf16> to vector<8x16x4xbf16>
    %10 = vector.shape_cast %9 : vector<8x16x4xbf16> to vector<128x4xbf16>
    %c0_4 = arith.constant 0 : index
    %c4 = arith.constant 4 : index
    %11 = vector.load %arg6[%c0_4, %c4] : memref<128x36xbf16, #tpu.memory_space<vmem>>, vector<128x4xbf16>
    tpu.vector_store %arg6[%c0_4, %c4], %10 {strides = array<i32>} : memref<128x36xbf16, #tpu.memory_space<vmem>>, vector<128x4xbf16>,
    %12 = vector.extract_strided_slice %5 {offsets = [0, 2, 0], sizes = [8, 16, 4], strides = [1, 1, 1]} : vector<8x18x4xbf16> to vector<8x16x4xbf16>
    %13 = vector.shape_cast %12 : vector<8x16x4xbf16> to vector<128x4xbf16>
    %c0_5 = arith.constant 0 : index
    %c8 = arith.constant 8 : index
    %14 = vector.load %arg6[%c0_5, %c8] : memref<128x36xbf16, #tpu.memory_space<vmem>>, vector<128x4xbf16>
    tpu.vector_store %arg6[%c0_5, %c8], %13 {strides = array<i32>} : memref<128x36xbf16, #tpu.memory_space<vmem>>, vector<128x4xbf16>,
    %c1_i32_6 = arith.constant 1 : i32
    %15 = arith.addi %1, %c1_i32_6 : i32
    %c0_7 = arith.constant 0 : index
    %16 = arith.index_cast %15 : i32 to index
    %c0_8 = arith.constant 0 : index
    %c0_9 = arith.constant 0 : index
    %17 = vector.load %arg2[%c0_7, %16, %c0_8, %c0_9] : memref<1x18x18x4xbf16, #tpu.memory_space<vmem>>, vector<1x8x18x4xbf16>
    %18 = vector.shape_cast %17 : vector<1x8x18x4xbf16> to vector<8x18x4xbf16>
    %19 = vector.extract_strided_slice %18 {offsets = [0, 0, 0], sizes = [8, 16, 4], strides = [1, 1, 1]} : vector<8x18x4xbf16> to vector<8x16x4xbf16>
    %20 = vector.shape_cast %19 : vector<8x16x4xbf16> to vector<128x4xbf16>
    %c0_10 = arith.constant 0 : index
    %c12 = arith.constant 12 : index
    %21 = vector.load %arg6[%c0_10, %c12] : memref<128x36xbf16, #tpu.memory_space<vmem>>, vector<128x4xbf16>
    tpu.vector_store %arg6[%c0_10, %c12], %20 {strides = array<i32>} : memref<128x36xbf16, #tpu.memory_space<vmem>>, vector<128x4xbf16>,
    %22 = vector.extract_strided_slice %18 {offsets = [0, 1, 0], sizes = [8, 16, 4], strides = [1, 1, 1]} : vector<8x18x4xbf16> to vector<8x16x4xbf16>
    %23 = vector.shape_cast %22 : vector<8x16x4xbf16> to vector<128x4xbf16>
    %c0_11 = arith.constant 0 : index
    %c16 = arith.constant 16 : index
    %24 = vector.load %arg6[%c0_11, %c16] : memref<128x36xbf16, #tpu.memory_space<vmem>>, vector<128x4xbf16>
    tpu.vector_store %arg6[%c0_11, %c16], %23 {strides = array<i32>} : memref<128x36xbf16, #tpu.memory_space<vmem>>, vector<128x4xbf16>,
    %25 = vector.extract_strided_slice %18 {offsets = [0, 2, 0], sizes = [8, 16, 4], strides = [1, 1, 1]} : vector<8x18x4xbf16> to vector<8x16x4xbf16>
    %26 = vector.shape_cast %25 : vector<8x16x4xbf16> to vector<128x4xbf16>
    %c0_12 = arith.constant 0 : index
    %c20 = arith.constant 20 : index
    %27 = vector.load %arg6[%c0_12, %c20] : memref<128x36xbf16, #tpu.memory_space<vmem>>, vector<128x4xbf16>
    tpu.vector_store %arg6[%c0_12, %c20], %26 {strides = array<i32>} : memref<128x36xbf16, #tpu.memory_space<vmem>>, vector<128x4xbf16>,
    %c2_i32 = arith.constant 2 : i32
    %28 = arith.addi %1, %c2_i32 : i32
    %c0_13 = arith.constant 0 : index
    %29 = arith.index_cast %28 : i32 to index
    %c0_14 = arith.constant 0 : index
    %c0_15 = arith.constant 0 : index
    %30 = vector.load %arg2[%c0_13, %29, %c0_14, %c0_15] : memref<1x18x18x4xbf16, #tpu.memory_space<vmem>>, vector<1x8x18x4xbf16>
    %31 = vector.shape_cast %30 : vector<1x8x18x4xbf16> to vector<8x18x4xbf16>
    %32 = vector.extract_strided_slice %31 {offsets = [0, 0, 0], sizes = [8, 16, 4], strides = [1, 1, 1]} : vector<8x18x4xbf16> to vector<8x16x4xbf16>
    %33 = vector.shape_cast %32 : vector<8x16x4xbf16> to vector<128x4xbf16>
    %c0_16 = arith.constant 0 : index
    %c24 = arith.constant 24 : index
    %34 = vector.load %arg6[%c0_16, %c24] : memref<128x36xbf16, #tpu.memory_space<vmem>>, vector<128x4xbf16>
    tpu.vector_store %arg6[%c0_16, %c24], %33 {strides = array<i32>} : memref<128x36xbf16, #tpu.memory_space<vmem>>, vector<128x4xbf16>,
    %35 = vector.extract_strided_slice %31 {offsets = [0, 1, 0], sizes = [8, 16, 4], strides = [1, 1, 1]} : vector<8x18x4xbf16> to vector<8x16x4xbf16>
    %36 = vector.shape_cast %35 : vector<8x16x4xbf16> to vector<128x4xbf16>
    %c0_17 = arith.constant 0 : index
    %c28 = arith.constant 28 : index
    %37 = vector.load %arg6[%c0_17, %c28] : memref<128x36xbf16, #tpu.memory_space<vmem>>, vector<128x4xbf16>
    tpu.vector_store %arg6[%c0_17, %c28], %36 {strides = array<i32>} : memref<128x36xbf16, #tpu.memory_space<vmem>>, vector<128x4xbf16>,
    %38 = vector.extract_strided_slice %31 {offsets = [0, 2, 0], sizes = [8, 16, 4], strides = [1, 1, 1]} : vector<8x18x4xbf16> to vector<8x16x4xbf16>
    %39 = vector.shape_cast %38 : vector<8x16x4xbf16> to vector<128x4xbf16>
    %c0_18 = arith.constant 0 : index
    %c32 = arith.constant 32 : index
    %40 = vector.load %arg6[%c0_18, %c32] : memref<128x36xbf16, #tpu.memory_space<vmem>>, vector<128x4xbf16>
    tpu.vector_store %arg6[%c0_18, %c32], %39 {strides = array<i32>} : memref<128x36xbf16, #tpu.memory_space<vmem>>, vector<128x4xbf16>,
    %c0_19 = arith.constant 0 : index
    %c0_20 = arith.constant 0 : index
    %41 = vector.load %arg3[%c0_19, %c0_20] : memref<8x36xbf16, #tpu.memory_space<vmem>>, vector<8x36xbf16>
    %c0_21 = arith.constant 0 : index
    %c0_22 = arith.constant 0 : index
    %42 = vector.load %arg6[%c0_21, %c0_22] : memref<128x36xbf16, #tpu.memory_space<vmem>>, vector<128x36xbf16>
    %cst = arith.constant dense<0.000000e+00> : vector<8x128xf32>
    %43 = tpu.matmul %41, %42, %cst {dimension_numbers = #tpu.dot_dimension_numbers<[1], [1], [0], [0], [0, 0, 1, 0], [], []>} : vector<8x36xbf16>, vector<128x36xbf16>, vector<8x128xf32> -> vector<8x128xf32>
    %c0_23 = arith.constant 0 : index
    %c0_24 = arith.constant 0 : index
    %44 = vector.load %arg4[%c0_23, %c0_24] : memref<8x1xf32, #tpu.memory_space<vmem>>, vector<8x1xf32>
    %45 = vector.broadcast %44 : vector<8x1xf32> to vector<8x128xf32>
    %46 = arith.addf %43, %45 : vector<8x128xf32>
    %47 = vector.extract_strided_slice %46 {offsets = [0, 0], sizes = [4, 128], strides = [1, 1]} : vector<8x128xf32> to vector<4x128xf32>
    %c0_25 = arith.constant 0 : index
    %c0_26 = arith.constant 0 : index
    %c0_27 = arith.constant 0 : index
    %48 = vector.load %arg5[%c0_25, %c0_26, %c0_27] : memref<1x4x128xf32, #tpu.memory_space<vmem>>, vector<1x4x128xf32>
    %49 = vector.shape_cast %48 : vector<1x4x128xf32> to vector<4x128xf32>
    %50 = vector.shape_cast %47 : vector<4x128xf32> to vector<1x4x128xf32>
    tpu.vector_store %arg5[%c0_25, %c0_26, %c0_27], %50 {strides = array<i32>} : memref<1x4x128xf32, #tpu.memory_space<vmem>>, vector<1x4x128xf32>,
    return
  }
  func.func @transform_0(%arg0: i32, %arg1: i32) -> (i32, i32, i32, i32) {
    %c0_i32 = arith.constant 0 : i32
    %c0_i32_0 = arith.constant 0 : i32
    %c0_i32_1 = arith.constant 0 : i32
    %c0_i32_2 = arith.constant 0 : i32
    return %arg0, %c0_i32, %c0_i32_0, %c0_i32_1 : i32, i32, i32, i32
  }
  func.func @transform_1(%arg0: i32, %arg1: i32) -> (i32, i32) {
    %c0_i32 = arith.constant 0 : i32
    %c0_i32_0 = arith.constant 0 : i32
    %c0_i32_1 = arith.constant 0 : i32
    return %c0_i32, %c0_i32_0 : i32, i32
  }
  func.func @transform_2(%arg0: i32, %arg1: i32) -> (i32, i32) {
    %c0_i32 = arith.constant 0 : i32
    %c0_i32_0 = arith.constant 0 : i32
    %c0_i32_1 = arith.constant 0 : i32
    return %c0_i32, %c0_i32_0 : i32, i32
  }
  func.func @transform_3(%arg0: i32, %arg1: i32) -> (i32, i32, i32) {
    %c0_i32 = arith.constant 0 : i32
    %c0_i32_0 = arith.constant 0 : i32
    return %arg0, %c0_i32, %arg1 : i32, i32, i32
  }
}

</mosaic_0001>

<llo_original>
// kernel: tpu_custom_call.1
$region0: #{tpu_custom_call.1}
  #allocation0 [shape = 'u32[]', space=smem, size = 0x4, offset = 0x4, fixed_abs, tag = 'smem constant byte address 0x4 - core index']
  #allocation1 [shape = 'u32[144,128]{1,0:T(1,128)}', space=vmem, size = 0x12000, scoped, tag = 'internal scratch']
  #allocation2 [shape = 'bf16[128,36]{1,0:T(16,128)(2,1)}', space=vmem, size = 0x8000, scoped, tag = 'scratch operand']
  %s0 = inlined_call_operand.vmem [shape: bf16[2,18,18,4], index: 0, kind: input, shape index: {}]
  %s1 = inlined_call_operand.vmem [shape: bf16[8,36], index: 1, kind: input, shape index: {}]
  %s2 = inlined_call_operand.vmem [shape: f32[8,1], index: 2, kind: input, shape index: {}]
  %s3 = inlined_call_operand.hbm [shape: f32[2,4,256], index: 3, kind: output, shape index: {}]
  %s4 = sld [smem:[#allocation0]]
  $region45: #{tpu_custom_call.1} parent=0
    _
  %s6 = ssub.s32 1, %s4
  %s7 = scalar_select 0, %s6, %s4
  $region1: #{tpu_custom_call.1} parent=0
    #allocation3 [shape = 'u8[4096]{0}', space=vmem, size = 0x1000, scoped, tag = 'output window, operand 0']
    #allocation4 [shape = 's32[2]{0}', space=sflag, size = 0x8, scoped, tag = 'scoped memory for tpu_custom_call.1']
    %8 = vsyncpa [#allocation4], 0
    %s9 = scalar_lea.sflag [#allocation4], 1
    %10 = vsyncpa %s9, 0
    loop: start=0, step=1, limit=6
    $region2: #{tpu_custom_call.1} parent=1 // loop_pre_header
      _
    $region3: #{tpu_custom_call.1} parent=1 // loop_header
      %s12 = sphi 0, %s16
      %p13 = scmp.ge.s32.totalorder %s12, 6
      %s19 = sphi 0, %s31
      %s20 = sphi 0, %s27
      %s21 = sphi 0, %s19
      %s22 = sphi 0, %s20
      %s23 = sphi 0, %s21
      %s24 = sphi 0, %s22
      %s34 = sphi 0, %s36
      %s37 = sphi 0, %s34
      %s38 = sphi 0, %s37
      %s54 = sphi 0, %s38
      %s58 = sphi 0, %s58
      %s60 = sphi 0, %s58
      %s61 = sphi 0, %s60
      %s75 = sphi 0, %s61
      %s79 = sphi 0, %s79
      %s81 = sphi 0, %s79
      %s82 = sphi 0, %s81
      %s96 = sphi 0, %s82
      %s104 = sphi 0, %s106
      %s107 = sphi 0, %s104
      %s108 = sphi 0, %s107
      %s124 = sphi 0, %s108
    $region4: #{tpu_custom_call.1} parent=1 // loop_header_branch
      %15 = sbr.rel (%p13) target = $region8
    $region5: #{tpu_custom_call.1} parent=1 // loop_body
      %s17 = ssub.s32 %s12, 1
      %s18 = ssub.s32 %s12, 2
      %s25 = sadd.s32 1, %s20
      %p26 = scmp.ge.s32.totalorder %s25, 2
      %s27 = scalar_select %p26, 0, %s25
      %s28 = sadd.s32 1, %s19
      %s29 = scalar_select %p26, %s28, %s19
      %p30 = scmp.ge.s32.totalorder %s29, 2
      %s31 = scalar_select %p30, 0, %s29
      %s32 = ssub.s32 %s19, %s31
      %p33 = scmp.eq.s32.totalorder %s32, 0
      %s35 = sadd.s32 %s34, 1
      %s36 = scalar_select %p33, %s34, %s35
      %p39 = pneg %p33
      %p40 = scmp.eq.s32.totalorder %s12, 3
      %p41 = por %p39, %p40
      %p42 = scmp.ne.s32.totalorder %s34, %s37
      %p43 = scmp.eq.s32.totalorder %s12, 0
      %p44 = por %p42, %p43
      %p45 = scmp.ne.s32.totalorder %s34, %s37
      %p46 = scmp.eq.s32.totalorder %s17, 3
      %p47 = por %p45, %p46
      %p48 = scmp.ne.s32.totalorder %s37, %s38
      %p49 = scmp.eq.s32.totalorder %s17, 0
      %p50 = por %p48, %p49
      %p51 = scmp.ne.s32.totalorder %s37, %s38
      %p52 = scmp.eq.s32.totalorder %s18, 3
      %p53 = por %p51, %p52
      %p55 = scmp.ne.s32.totalorder %s38, %s54
      %p56 = scmp.eq.s32.totalorder %s18, 0
      %p57 = por %p55, %p56
      %s59 = sadd.s32 %s58, 1
      %p62 = scmp.eq.s32.totalorder %s12, 3
      %p63 = scmp.ne.s32.totalorder %s58, %s60
      %p64 = scmp.eq.s32.totalorder %s12, 0
      %p65 = por %p63, %p64
      %p66 = scmp.ne.s32.totalorder %s58, %s60
      %p67 = scmp.eq.s32.totalorder %s17, 3
      %p68 = por %p66, %p67
      %p69 = scmp.ne.s32.totalorder %s60, %s61
      %p70 = scmp.eq.s32.totalorder %s17, 0
      %p71 = por %p69, %p70
      %p72 = scmp.ne.s32.totalorder %s60, %s61
      %p73 = scmp.eq.s32.totalorder %s18, 3
      %p74 = por %p72, %p73
      %p76 = scmp.ne.s32.totalorder %s61, %s75
      %p77 = scmp.eq.s32.totalorder %s18, 0
      %p78 = por %p76, %p77
      %s80 = sadd.s32 %s79, 1
      %p83 = scmp.eq.s32.totalorder %s12, 3
      %p84 = scmp.ne.s32.totalorder %s79, %s81
      %p85 = scmp.eq.s32.totalorder %s12, 0
      %p86 = por %p84, %p85
      %p87 = scmp.ne.s32.totalorder %s79, %s81
      %p88 = scmp.eq.s32.totalorder %s17, 3
      %p89 = por %p87, %p88
      %p90 = scmp.ne.s32.totalorder %s81, %s82
      %p91 = scmp.eq.s32.totalorder %s17, 0
      %p92 = por %p90, %p91
      %p93 = scmp.ne.s32.totalorder %s81, %s82
      %p94 = scmp.eq.s32.totalorder %s18, 3
      %p95 = por %p93, %p94
      %p97 = scmp.ne.s32.totalorder %s82, %s96
      %p98 = scmp.eq.s32.totalorder %s18, 0
      %p99 = por %p97, %p98
      %s100 = ssub.s32 %s19, %s31
      %s101 = ssub.s32 %s20, %s27
      %s102 = sor.u32 %s100, %s101
      %p103 = scmp.eq.s32.totalorder %s102, 0
      %s105 = sadd.s32 %s104, 1
      %s106 = scalar_select %p103, %s104, %s105
      %p109 = pneg %p103
      %p110 = scmp.eq.s32.totalorder %s12, 3
      %p111 = por %p109, %p110
      %p112 = scmp.ne.s32.totalorder %s104, %s107
      %p113 = scmp.eq.s32.totalorder %s12, 0
      %p114 = por %p112, %p113
      %p115 = scmp.ne.s32.totalorder %s104, %s107
      %p116 = scmp.eq.s32.totalorder %s17, 3
      %p117 = por %p115, %p116
      %p118 = scmp.ne.s32.totalorder %s107, %s108
      %p119 = scmp.eq.s32.totalorder %s17, 0
      %p120 = por %p118, %p119
      %p121 = scmp.ne.s32.totalorder %s107, %s108
      %p122 = scmp.eq.s32.totalorder %s18, 3
      %p123 = por %p121, %p122
      %p125 = scmp.ne.s32.totalorder %s108, %s124
      %p126 = scmp.eq.s32.totalorder %s18, 0
      %p127 = por %p125, %p126
      %p128 = scmp.le.s32.totalorder 1, %s12
      %p129 = scmp.lt.s32.totalorder %s12, 5
      %p130 = pnand %p128, %p129
      %p131 = pneg %p130
      // Predicated region
      $region9: #{tpu_custom_call.1} parent=5 // pred_check
        _
      $region10: #{tpu_custom_call.1} parent=5 // pred_check_branch
        %133 = sbr.rel (%p130) target = $region12
      $region11: #{tpu_custom_call.1} parent=5 // pred_region
        %s134 = ssub.s32 %s12, 1
        // Predicated region
        $region13: #{tpu_custom_call.1} parent=11 // pred_check
          %p135 = pneg %p71
        $region14: #{tpu_custom_call.1} parent=11 // pred_check_branch
          %137 = sbr.rel (%p135) target = $region16
        $region15: #{tpu_custom_call.1} parent=11 // pred_region
          _
        $region16: #{tpu_custom_call.1} parent=11 // pred_fallthru
          _
        // Predicated region
        $region17: #{tpu_custom_call.1} parent=11 // pred_check
          %p138 = pneg %p92
        $region18: #{tpu_custom_call.1} parent=11 // pred_check_branch
          %140 = sbr.rel (%p138) target = $region20
        $region19: #{tpu_custom_call.1} parent=11 // pred_region
          _
        $region20: #{tpu_custom_call.1} parent=11 // pred_fallthru
          _
      $region12: #{tpu_custom_call.1} parent=5 // pred_fallthru
        _
      %p141 = scmp.lt.s32.totalorder %s12, 4
      // Predicated region
      $region21: #{tpu_custom_call.1} parent=5 // pred_check
        %p142 = pneg %p141
      $region22: #{tpu_custom_call.1} parent=5 // pred_check_branch
        %144 = sbr.rel (%p142) target = $region24
      $region23: #{tpu_custom_call.1} parent=5 // pred_region
        // Predicated region
        $region25: #{tpu_custom_call.1} parent=23 // pred_check
          %p145 = pneg %p44
        $region26: #{tpu_custom_call.1} parent=23 // pred_check_branch
          %147 = sbr.rel (%p145) target = $region28
        $region27: #{tpu_custom_call.1} parent=23 // pred_region
          %p148 = scmp.lt.s32.totalorder %s19, 1
          %s149 = scalar_select %p148, %s19, 1
          %s150 = smul.addr %s149, 54
          %s151 = smul.addr %s150, 4
          %s152 = scalar_lea.vmem %s0, %s151
        $region28: #{tpu_custom_call.1} parent=23 // pred_fallthru
          _
      $region24: #{tpu_custom_call.1} parent=5 // pred_fallthru
        _
      %p153 = scmp.le.s32.totalorder 1, %s12
      %p154 = scmp.lt.s32.totalorder %s12, 5
      %p155 = pnand %p153, %p154
      %p156 = pneg %p155
      // Predicated region
      $region29: #{tpu_custom_call.1} parent=5 // pred_check
        _
      $region30: #{tpu_custom_call.1} parent=5 // pred_check_branch
        %158 = sbr.rel (%p155) target = $region32
      $region31: #{tpu_custom_call.1} parent=5 // pred_region
        %s159 = ssub.s32 %s12, 1
        %p160 = scmp.lt.s32.totalorder %s21, 1
        %s161 = scalar_select %p160, %s21, 1
        %s162 = smul.addr %s161, 54
        %s163 = smul.addr %s162, 4
        %s164 = scalar_lea.vmem %s0, %s163
        %p165 = pneg %p50
        %p166 = pneg %p47
        %p167 = pneg %p71
        %p168 = pneg %p68
        %p169 = pneg %p92
        %p170 = pneg %p89
        %p171 = pneg %p120
        %p172 = pneg %p117
        %s173 = sand.u32 %s107, 1
        %s174 = scalar_lea.sflag [#allocation4], %s173
        %s175 = sand.u32 %s107, 1
        %s176 = smul.addr %s175, 4
        %s177 = scalar_lea.vmem [#allocation3], %s176
        %p178 = scmp.lt.s32.totalorder %s21, 1
        %s179 = scalar_select %p178, %s21, 1
        %s180 = smul.addr %s179, 54
        %s181 = smul.addr %s180, 4
        %s182 = scalar_lea.vmem %s0, %s181
        %s184 = smul.u32 %s22, 8
        %s185 = smul.u32 %s184, 3
        %s186 = smul.addr %s185, 4
        %s187 = scalar_lea.vmem %s182, %s186
        %v188 = vld [vmem:[%s187] sm:$0xf]
        %v189 = vld [vmem:[%s187 + $0x4] sm:$0xf]
        %v190 = vld [vmem:[%s187 + $0x8] sm:$0x1]
        %v191 = vld [vmem:[%s187 + $0xc] sm:$0xf]
        %v192 = vld [vmem:[%s187 + $0x10] sm:$0xf]
        %v193 = vld [vmem:[%s187 + $0x14] sm:$0x1]
        %v194 = vld [vmem:[%s187 + $0x18] sm:$0xf]
        %v195 = vld [vmem:[%s187 + $0x1c] sm:$0xf]
        %v196 = vld [vmem:[%s187 + $0x20] sm:$0x1]
        %v197 = vld [vmem:[%s187 + $0x24] sm:$0xf]
        %v198 = vld [vmem:[%s187 + $0x28] sm:$0xf]
        %v199 = vld [vmem:[%s187 + $0x2c] sm:$0x1]
        %v200 = vld [vmem:[%s187 + $0x30] sm:$0xf]
        %v201 = vld [vmem:[%s187 + $0x34] sm:$0xf]
        %v202 = vld [vmem:[%s187 + $0x38] sm:$0x1]
        %v203 = vld [vmem:[%s187 + $0x3c] sm:$0xf]
        %v204 = vld [vmem:[%s187 + $0x40] sm:$0xf]
        %v205 = vld [vmem:[%s187 + $0x44] sm:$0x1]
        %v206 = vld [vmem:[%s187 + $0x48] sm:$0xf]
        %v207 = vld [vmem:[%s187 + $0x4c] sm:$0xf]
        %v208 = vld [vmem:[%s187 + $0x50] sm:$0x1]
        %v209 = vld [vmem:[%s187 + $0x54] sm:$0xf]
        %v210 = vld [vmem:[%s187 + $0x58] sm:$0xf]
        %v211 = vld [vmem:[%s187 + $0x5c] sm:$0x1]
        %v228 = vunpack.c.l.b16 %v188
        %v229 = vunpack.c.l.b16 %v189
        %v230 = vunpack.c.l.b16 %v191
        %v231 = vunpack.c.l.b16 %v192
        %v232 = vunpack.c.l.b16 %v194
        %v233 = vunpack.c.l.b16 %v195
        %v234 = vunpack.c.l.b16 %v197
        %v235 = vunpack.c.l.b16 %v198
        %v236 = vunpack.c.l.b16 %v200
        %v237 = vunpack.c.l.b16 %v201
        %v238 = vunpack.c.l.b16 %v203
        %v239 = vunpack.c.l.b16 %v204
        %v240 = vunpack.c.l.b16 %v206
        %v241 = vunpack.c.l.b16 %v207
        %v242 = vunpack.c.l.b16 %v209
        %v243 = vunpack.c.l.b16 %v210
        %v244 = vpack.c.b16 %v229, %v228
        %v245 = vpack.c.b16 %v231, %v230
        %v246 = vpack.c.b16 %v233, %v232
        %v247 = vpack.c.b16 %v235, %v234
        %v248 = vpack.c.b16 %v237, %v236
        %v249 = vpack.c.b16 %v239, %v238
        %v250 = vpack.c.b16 %v241, %v240
        %v251 = vpack.c.b16 %v243, %v242
        %vm260 = vcmask 31744
        %261 = vst.msk [vmem:[#allocation2] sm:$0xff] %vm260, %v244
        %262 = vst.msk [vmem:[#allocation2 + $0x8] sm:$0xff] %vm260, %v245
        %263 = vst.msk [vmem:[#allocation2 + $0x10] sm:$0xff] %vm260, %v246
        %264 = vst.msk [vmem:[#allocation2 + $0x18] sm:$0xff] %vm260, %v247
        %265 = vst.msk [vmem:[#allocation2 + $0x20] sm:$0xff] %vm260, %v248
        %266 = vst.msk [vmem:[#allocation2 + $0x28] sm:$0xff] %vm260, %v249
        %267 = vst.msk [vmem:[#allocation2 + $0x30] sm:$0xff] %vm260, %v250
        %268 = vst.msk [vmem:[#allocation2 + $0x38] sm:$0xff] %vm260, %v251
        %vm269 = vsmask.f32 3328
        %vm270 = vsmask.f32 7440
        %vm271 = vmor %vm269, %vm270
        %v273 = vshrl.u32 %v188, 16
        %v275 = vrot.slane %v273, 4
        %v276 = vshll.u32 %v188, 16
        %v278 = vrot.slane %v276, 5
        %v279 = vor.u32 %v275, %v278
        %v280 = vrot.slane %v279, 4
        %v282 = vshll.u32 %v189, 16
        %v284 = vrot.slane %v282, 5
        %v285 = vsel %vm271, %v280, %v284
        %v286 = vshrl.u32 %v189, 16
        %v288 = vrot.slane %v286, 4
        %v289 = vor.u32 %v288, %v284
        %v290 = vrot.slane %v289, 4
        %v292 = vshll.u32 %v190, 16
        %v294 = vrot.slane %v292, 5
        %v295 = vsel %vm271, %v290, %v294
        %v297 = vshrl.u32 %v191, 16
        %v299 = vrot.slane %v297, 4
        %v300 = vshll.u32 %v191, 16
        %v302 = vrot.slane %v300, 5
        %v303 = vor.u32 %v299, %v302
        %v304 = vrot.slane %v303, 4
        %v306 = vshll.u32 %v192, 16
        %v308 = vrot.slane %v306, 5
        %v309 = vsel %vm271, %v304, %v308
        %v310 = vshrl.u32 %v192, 16
        %v312 = vrot.slane %v310, 4
        %v313 = vor.u32 %v312, %v308
        %v314 = vrot.slane %v313, 4
        %v316 = vshll.u32 %v193, 16
        %v318 = vrot.slane %v316, 5
        %v319 = vsel %vm271, %v314, %v318
        %v321 = vshrl.u32 %v194, 16
        %v323 = vrot.slane %v321, 4
        %v324 = vshll.u32 %v194, 16
        %v326 = vrot.slane %v324, 5
        %v327 = vor.u32 %v323, %v326
        %v328 = vrot.slane %v327, 4
        %v330 = vshll.u32 %v195, 16
        %v332 = vrot.slane %v330, 5
        %v333 = vsel %vm271, %v328, %v332
        %v334 = vshrl.u32 %v195, 16
        %v336 = vrot.slane %v334, 4
        %v337 = vor.u32 %v336, %v332
        %v338 = vrot.slane %v337, 4
        %v340 = vshll.u32 %v196, 16
        %v342 = vrot.slane %v340, 5
        %v343 = vsel %vm271, %v338, %v342
        %v345 = vshrl.u32 %v197, 16
        %v347 = vrot.slane %v345, 4
        %v348 = vshll.u32 %v197, 16
        %v350 = vrot.slane %v348, 5
        %v351 = vor.u32 %v347, %v350
        %v352 = vrot.slane %v351, 4
        %v354 = vshll.u32 %v198, 16
        %v356 = vrot.slane %v354, 5
        %v357 = vsel %vm271, %v352, %v356
        %v358 = vshrl.u32 %v198, 16
        %v360 = vrot.slane %v358, 4
        %v361 = vor.u32 %v360, %v356
        %v362 = vrot.slane %v361, 4
        %v364 = vshll.u32 %v199, 16
        %v366 = vrot.slane %v364, 5
        %v367 = vsel %vm271, %v362, %v366
        %v369 = vshrl.u32 %v200, 16
        %v371 = vrot.slane %v369, 4
        %v372 = vshll.u32 %v200, 16
        %v374 = vrot.slane %v372, 5
        %v375 = vor.u32 %v371, %v374
        %v376 = vrot.slane %v375, 4
        %v378 = vshll.u32 %v201, 16
        %v380 = vrot.slane %v378, 5
        %v381 = vsel %vm271, %v376, %v380
        %v382 = vshrl.u32 %v201, 16
        %v384 = vrot.slane %v382, 4
        %v385 = vor.u32 %v384, %v380
        %v386 = vrot.slane %v385, 4
        %v388 = vshll.u32 %v202, 16
        %v390 = vrot.slane %v388, 5
        %v391 = vsel %vm271, %v386, %v390
        %v393 = vshrl.u32 %v203, 16
        %v395 = vrot.slane %v393, 4
        %v396 = vshll.u32 %v203, 16
        %v398 = vrot.slane %v396, 5
        %v399 = vor.u32 %v395, %v398
        %v400 = vrot.slane %v399, 4
        %v402 = vshll.u32 %v204, 16
        %v404 = vrot.slane %v402, 5
        %v405 = vsel %vm271, %v400, %v404
        %v406 = vshrl.u32 %v204, 16
        %v408 = vrot.slane %v406, 4
        %v409 = vor.u32 %v408, %v404
        %v410 = vrot.slane %v409, 4
        %v412 = vshll.u32 %v205, 16
        %v414 = vrot.slane %v412, 5
        %v415 = vsel %vm271, %v410, %v414
        %v417 = vshrl.u32 %v206, 16
        %v419 = vrot.slane %v417, 4
        %v420 = vshll.u32 %v206, 16
        %v422 = vrot.slane %v420, 5
        %v423 = vor.u32 %v419, %v422
        %v424 = vrot.slane %v423, 4
        %v426 = vshll.u32 %v207, 16
        %v428 = vrot.slane %v426, 5
        %v429 = vsel %vm271, %v424, %v428
        %v430 = vshrl.u32 %v207, 16
        %v432 = vrot.slane %v430, 4
        %v433 = vor.u32 %v432, %v428
        %v434 = vrot.slane %v433, 4
        %v436 = vshll.u32 %v208, 16
        %v438 = vrot.slane %v436, 5
        %v439 = vsel %vm271, %v434, %v438
        %v441 = vshrl.u32 %v209, 16
        %v443 = vrot.slane %v441, 4
        %v444 = vshll.u32 %v209, 16
        %v446 = vrot.slane %v444, 5
        %v447 = vor.u32 %v443, %v446
        %v448 = vrot.slane %v447, 4
        %v450 = vshll.u32 %v210, 16
        %v452 = vrot.slane %v450, 5
        %v453 = vsel %vm271, %v448, %v452
        %v454 = vshrl.u32 %v210, 16
        %v456 = vrot.slane %v454, 4
        %v457 = vor.u32 %v456, %v452
        %v458 = vrot.slane %v457, 4
        %v460 = vshll.u32 %v211, 16
        %v462 = vrot.slane %v460, 5
        %v463 = vsel %vm271, %v458, %v462
        %v464 = vunpack.c.l.b16 %v285
        %v465 = vunpack.c.l.b16 %v295
        %v466 = vunpack.c.l.b16 %v309
        %v467 = vunpack.c.l.b16 %v319
        %v468 = vunpack.c.l.b16 %v333
        %v469 = vunpack.c.l.b16 %v343
        %v470 = vunpack.c.l.b16 %v357
        %v471 = vunpack.c.l.b16 %v367
        %v472 = vunpack.c.l.b16 %v381
        %v473 = vunpack.c.l.b16 %v391
        %v474 = vunpack.c.l.b16 %v405
        %v475 = vunpack.c.l.b16 %v415
        %v476 = vunpack.c.l.b16 %v429
        %v477 = vunpack.c.l.b16 %v439
        %v478 = vunpack.c.l.b16 %v453
        %v479 = vunpack.c.l.b16 %v463
        %v480 = vpack.c.b16 %v465, %v464
        %v481 = vpack.c.b16 %v467, %v466
        %v482 = vpack.c.b16 %v469, %v468
        %v483 = vpack.c.b16 %v471, %v470
        %v484 = vpack.c.b16 %v473, %v472
        %v485 = vpack.c.b16 %v475, %v474
        %v486 = vpack.c.b16 %v477, %v476
        %v487 = vpack.c.b16 %v479, %v478
        %488 = vrot.lane.b32.xlu0 %v480, 4
        %v489 = vpop.permute.xlu0 %488
        %490 = vrot.lane.b32.xlu0 %v481, 4
        %v491 = vpop.permute.xlu0 %490
        %492 = vrot.lane.b32.xlu0 %v482, 4
        %v493 = vpop.permute.xlu0 %492
        %494 = vrot.lane.b32.xlu0 %v483, 4
        %v495 = vpop.permute.xlu0 %494
        %496 = vrot.lane.b32.xlu0 %v484, 4
        %v497 = vpop.permute.xlu0 %496
        %498 = vrot.lane.b32.xlu0 %v485, 4
        %v499 = vpop.permute.xlu0 %498
        %500 = vrot.lane.b32.xlu0 %v486, 4
        %v501 = vpop.permute.xlu0 %500
        %502 = vrot.lane.b32.xlu0 %v487, 4
        %v503 = vpop.permute.xlu0 %502
        %vm512 = vcmask 64544
        %513 = vst.msk [vmem:[#allocation2] sm:$0xff] %vm512, %v489
        %514 = vst.msk [vmem:[#allocation2 + $0x8] sm:$0xff] %vm512, %v491
        %515 = vst.msk [vmem:[#allocation2 + $0x10] sm:$0xff] %vm512, %v493
        %516 = vst.msk [vmem:[#allocation2 + $0x18] sm:$0xff] %vm512, %v495
        %517 = vst.msk [vmem:[#allocation2 + $0x20] sm:$0xff] %vm512, %v497
        %518 = vst.msk [vmem:[#allocation2 + $0x28] sm:$0xff] %vm512, %v499
        %519 = vst.msk [vmem:[#allocation2 + $0x30] sm:$0xff] %vm512, %v501
        %520 = vst.msk [vmem:[#allocation2 + $0x38] sm:$0xff] %vm512, %v503
        %vm529 = vcmask 1042432
        %vm530 = vcmask 1046532
        %vm531 = vmor %vm529, %vm530
        %v532 = vrot.slane %v188, 5
        %v533 = vrot.slane %v532, 4
        %v534 = vrot.slane %v189, 5
        %v535 = vsel %vm531, %v533, %v534
        %v536 = vrot.slane %v534, 4
        %v537 = vrot.slane %v190, 5
        %v538 = vsel %vm531, %v536, %v537
        %v539 = vrot.slane %v191, 5
        %v540 = vrot.slane %v539, 4
        %v541 = vrot.slane %v192, 5
        %v542 = vsel %vm531, %v540, %v541
        %v543 = vrot.slane %v541, 4
        %v544 = vrot.slane %v193, 5
        %v545 = vsel %vm531, %v543, %v544
        %v546 = vrot.slane %v194, 5
        %v547 = vrot.slane %v546, 4
        %v548 = vrot.slane %v195, 5
        %v549 = vsel %vm531, %v547, %v548
        %v550 = vrot.slane %v548, 4
        %v551 = vrot.slane %v196, 5
        %v552 = vsel %vm531, %v550, %v551
        %v553 = vrot.slane %v197, 5
        %v554 = vrot.slane %v553, 4
        %v555 = vrot.slane %v198, 5
        %v556 = vsel %vm531, %v554, %v555
        %v557 = vrot.slane %v555, 4
        %v558 = vrot.slane %v199, 5
        %v559 = vsel %vm531, %v557, %v558
        %v560 = vrot.slane %v200, 5
        %v561 = vrot.slane %v560, 4
        %v562 = vrot.slane %v201, 5
        %v563 = vsel %vm531, %v561, %v562
        %v564 = vrot.slane %v562, 4
        %v565 = vrot.slane %v202, 5
        %v566 = vsel %vm531, %v564, %v565
        %v567 = vrot.slane %v203, 5
        %v568 = vrot.slane %v567, 4
        %v569 = vrot.slane %v204, 5
        %v570 = vsel %vm531, %v568, %v569
        %v571 = vrot.slane %v569, 4
        %v572 = vrot.slane %v205, 5
        %v573 = vsel %vm531, %v571, %v572
        %v574 = vrot.slane %v206, 5
        %v575 = vrot.slane %v574, 4
        %v576 = vrot.slane %v207, 5
        %v577 = vsel %vm531, %v575, %v576
        %v578 = vrot.slane %v576, 4
        %v579 = vrot.slane %v208, 5
        %v580 = vsel %vm531, %v578, %v579
        %v581 = vrot.slane %v209, 5
        %v582 = vrot.slane %v581, 4
        %v583 = vrot.slane %v210, 5
        %v584 = vsel %vm531, %v582, %v583
        %v585 = vrot.slane %v583, 4
        %v586 = vrot.slane %v211, 5
        %v587 = vsel %vm531, %v585, %v586
        %v588 = vunpack.c.l.b16 %v535
        %v589 = vunpack.c.l.b16 %v538
        %v590 = vunpack.c.l.b16 %v542
        %v591 = vunpack.c.l.b16 %v545
        %v592 = vunpack.c.l.b16 %v549
        %v593 = vunpack.c.l.b16 %v552
        %v594 = vunpack.c.l.b16 %v556
        %v595 = vunpack.c.l.b16 %v559
        %v596 = vunpack.c.l.b16 %v563
        %v597 = vunpack.c.l.b16 %v566
        %v598 = vunpack.c.l.b16 %v570
        %v599 = vunpack.c.l.b16 %v573
        %v600 = vunpack.c.l.b16 %v577
        %v601 = vunpack.c.l.b16 %v580
        %v602 = vunpack.c.l.b16 %v584
        %v603 = vunpack.c.l.b16 %v587
        %v604 = vpack.c.b16 %v589, %v588
        %v605 = vpack.c.b16 %v591, %v590
        %v606 = vpack.c.b16 %v593, %v592
        %v607 = vpack.c.b16 %v595, %v594
        %v608 = vpack.c.b16 %v597, %v596
        %v609 = vpack.c.b16 %v599, %v598
        %v610 = vpack.c.b16 %v601, %v600
        %v611 = vpack.c.b16 %v603, %v602
        %612 = vrot.lane.b32.xlu0 %v604, 8
        %v613 = vpop.permute.xlu0 %612
        %614 = vrot.lane.b32.xlu0 %v605, 8
        %v615 = vpop.permute.xlu0 %614
        %616 = vrot.lane.b32.xlu0 %v606, 8
        %v617 = vpop.permute.xlu0 %616
        %618 = vrot.lane.b32.xlu0 %v607, 8
        %v619 = vpop.permute.xlu0 %618
        %620 = vrot.lane.b32.xlu0 %v608, 8
        %v621 = vpop.permute.xlu0 %620
        %622 = vrot.lane.b32.xlu0 %v609, 8
        %v623 = vpop.permute.xlu0 %622
        %624 = vrot.lane.b32.xlu0 %v610, 8
        %v625 = vpop.permute.xlu0 %624
        %626 = vrot.lane.b32.xlu0 %v611, 8
        %v627 = vpop.permute.xlu0 %626
        %vm636 = vcmask 97344
        %637 = vst.msk [vmem:[#allocation2] sm:$0xff] %vm636, %v613
        %638 = vst.msk [vmem:[#allocation2 + $0x8] sm:$0xff] %vm636, %v615
        %639 = vst.msk [vmem:[#allocation2 + $0x10] sm:$0xff] %vm636, %v617
        %640 = vst.msk [vmem:[#allocation2 + $0x18] sm:$0xff] %vm636, %v619
        %641 = vst.msk [vmem:[#allocation2 + $0x20] sm:$0xff] %vm636, %v621
        %642 = vst.msk [vmem:[#allocation2 + $0x28] sm:$0xff] %vm636, %v623
        %643 = vst.msk [vmem:[#allocation2 + $0x30] sm:$0xff] %vm636, %v625
        %644 = vst.msk [vmem:[#allocation2 + $0x38] sm:$0xff] %vm636, %v627
        %s645 = sadd.s32 %s184, 1
        %s646 = smul.u32 %s645, 3
        %s647 = smul.addr %s646, 4
        %s648 = scalar_lea.vmem %s182, %s647
        %v649 = vld [vmem:[%s648] sm:$0xf]
        %v650 = vld [vmem:[%s648 + $0x4] sm:$0xf]
        %v651 = vld [vmem:[%s648 + $0x8] sm:$0x1]
        %v652 = vld [vmem:[%s648 + $0xc] sm:$0xf]
        %v653 = vld [vmem:[%s648 + $0x10] sm:$0xf]
        %v654 = vld [vmem:[%s648 + $0x14] sm:$0x1]
        %v655 = vld [vmem:[%s648 + $0x18] sm:$0xf]
        %v656 = vld [vmem:[%s648 + $0x1c] sm:$0xf]
        %v657 = vld [vmem:[%s648 + $0x20] sm:$0x1]
        %v658 = vld [vmem:[%s648 + $0x24] sm:$0xf]
        %v659 = vld [vmem:[%s648 + $0x28] sm:$0xf]
        %v660 = vld [vmem:[%s648 + $0x2c] sm:$0x1]
        %v661 = vld [vmem:[%s648 + $0x30] sm:$0xf]
        %v662 = vld [vmem:[%s648 + $0x34] sm:$0xf]
        %v663 = vld [vmem:[%s648 + $0x38] sm:$0x1]
        %v664 = vld [vmem:[%s648 + $0x3c] sm:$0xf]
        %v665 = vld [vmem:[%s648 + $0x40] sm:$0xf]
        %v666 = vld [vmem:[%s648 + $0x44] sm:$0x1]
        %v667 = vld [vmem:[%s648 + $0x48] sm:$0xf]
        %v668 = vld [vmem:[%s648 + $0x4c] sm:$0xf]
        %v669 = vld [vmem:[%s648 + $0x50] sm:$0x1]
        %v670 = vld [vmem:[%s648 + $0x54] sm:$0xf]
        %v671 = vld [vmem:[%s648 + $0x58] sm:$0xf]
        %v672 = vld [vmem:[%s648 + $0x5c] sm:$0x1]
        %v689 = vunpack.c.l.b16 %v649
        %v690 = vunpack.c.l.b16 %v650
        %v691 = vunpack.c.l.b16 %v652
        %v692 = vunpack.c.l.b16 %v653
        %v693 = vunpack.c.l.b16 %v655
        %v694 = vunpack.c.l.b16 %v656
        %v695 = vunpack.c.l.b16 %v658
        %v696 = vunpack.c.l.b16 %v659
        %v697 = vunpack.c.l.b16 %v661
        %v698 = vunpack.c.l.b16 %v662
        %v699 = vunpack.c.l.b16 %v664
        %v700 = vunpack.c.l.b16 %v665
        %v701 = vunpack.c.l.b16 %v667
        %v702 = vunpack.c.l.b16 %v668
        %v703 = vunpack.c.l.b16 %v670
        %v704 = vunpack.c.l.b16 %v671
        %v705 = vpack.c.b16 %v690, %v689
        %v706 = vpack.c.b16 %v692, %v691
        %v707 = vpack.c.b16 %v694, %v693
        %v708 = vpack.c.b16 %v696, %v695
        %v709 = vpack.c.b16 %v698, %v697
        %v710 = vpack.c.b16 %v700, %v699
        %v711 = vpack.c.b16 %v702, %v701
        %v712 = vpack.c.b16 %v704, %v703
        %713 = vrot.lane.b32.xlu0 %v705, 12
        %v714 = vpop.permute.xlu0 %713
        %715 = vrot.lane.b32.xlu0 %v706, 12
        %v716 = vpop.permute.xlu0 %715
        %717 = vrot.lane.b32.xlu0 %v707, 12
        %v718 = vpop.permute.xlu0 %717
        %719 = vrot.lane.b32.xlu0 %v708, 12
        %v720 = vpop.permute.xlu0 %719
        %721 = vrot.lane.b32.xlu0 %v709, 12
        %v722 = vpop.permute.xlu0 %721
        %723 = vrot.lane.b32.xlu0 %v710, 12
        %v724 = vpop.permute.xlu0 %723
        %725 = vrot.lane.b32.xlu0 %v711, 12
        %v726 = vpop.permute.xlu0 %725
        %727 = vrot.lane.b32.xlu0 %v712, 12
        %v728 = vpop.permute.xlu0 %727
        %vm737 = vcmask 130144
        %738 = vst.msk [vmem:[#allocation2] sm:$0xff] %vm737, %v714
        %739 = vst.msk [vmem:[#allocation2 + $0x8] sm:$0xff] %vm737, %v716
        %740 = vst.msk [vmem:[#allocation2 + $0x10] sm:$0xff] %vm737, %v718
        %741 = vst.msk [vmem:[#allocation2 + $0x18] sm:$0xff] %vm737, %v720
        %742 = vst.msk [vmem:[#allocation2 + $0x20] sm:$0xff] %vm737, %v722
        %743 = vst.msk [vmem:[#allocation2 + $0x28] sm:$0xff] %vm737, %v724
        %744 = vst.msk [vmem:[#allocation2 + $0x30] sm:$0xff] %vm737, %v726
        %745 = vst.msk [vmem:[#allocation2 + $0x38] sm:$0xff] %vm737, %v728
        %v747 = vshrl.u32 %v649, 16
        %v749 = vrot.slane %v747, 4
        %v750 = vshll.u32 %v649, 16
        %v752 = vrot.slane %v750, 5
        %v753 = vor.u32 %v749, %v752
        %v754 = vrot.slane %v753, 4
        %v756 = vshll.u32 %v650, 16
        %v758 = vrot.slane %v756, 5
        %v759 = vsel %vm271, %v754, %v758
        %v760 = vshrl.u32 %v650, 16
        %v762 = vrot.slane %v760, 4
        %v763 = vor.u32 %v762, %v758
        %v764 = vrot.slane %v763, 4
        %v766 = vshll.u32 %v651, 16
        %v768 = vrot.slane %v766, 5
        %v769 = vsel %vm271, %v764, %v768
        %v771 = vshrl.u32 %v652, 16
        %v773 = vrot.slane %v771, 4
        %v774 = vshll.u32 %v652, 16
        %v776 = vrot.slane %v774, 5
        %v777 = vor.u32 %v773, %v776
        %v778 = vrot.slane %v777, 4
        %v780 = vshll.u32 %v653, 16
        %v782 = vrot.slane %v780, 5
        %v783 = vsel %vm271, %v778, %v782
        %v784 = vshrl.u32 %v653, 16
        %v786 = vrot.slane %v784, 4
        %v787 = vor.u32 %v786, %v782
        %v788 = vrot.slane %v787, 4
        %v790 = vshll.u32 %v654, 16
        %v792 = vrot.slane %v790, 5
        %v793 = vsel %vm271, %v788, %v792
        %v795 = vshrl.u32 %v655, 16
        %v797 = vrot.slane %v795, 4
        %v798 = vshll.u32 %v655, 16
        %v800 = vrot.slane %v798, 5
        %v801 = vor.u32 %v797, %v800
        %v802 = vrot.slane %v801, 4
        %v804 = vshll.u32 %v656, 16
        %v806 = vrot.slane %v804, 5
        %v807 = vsel %vm271, %v802, %v806
        %v808 = vshrl.u32 %v656, 16
        %v810 = vrot.slane %v808, 4
        %v811 = vor.u32 %v810, %v806
        %v812 = vrot.slane %v811, 4
        %v814 = vshll.u32 %v657, 16
        %v816 = vrot.slane %v814, 5
        %v817 = vsel %vm271, %v812, %v816
        %v819 = vshrl.u32 %v658, 16
        %v821 = vrot.slane %v819, 4
        %v822 = vshll.u32 %v658, 16
        %v824 = vrot.slane %v822, 5
        %v825 = vor.u32 %v821, %v824
        %v826 = vrot.slane %v825, 4
        %v828 = vshll.u32 %v659, 16
        %v830 = vrot.slane %v828, 5
        %v831 = vsel %vm271, %v826, %v830
        %v832 = vshrl.u32 %v659, 16
        %v834 = vrot.slane %v832, 4
        %v835 = vor.u32 %v834, %v830
        %v836 = vrot.slane %v835, 4
        %v838 = vshll.u32 %v660, 16
        %v840 = vrot.slane %v838, 5
        %v841 = vsel %vm271, %v836, %v840
        %v843 = vshrl.u32 %v661, 16
        %v845 = vrot.slane %v843, 4
        %v846 = vshll.u32 %v661, 16
        %v848 = vrot.slane %v846, 5
        %v849 = vor.u32 %v845, %v848
        %v850 = vrot.slane %v849, 4
        %v852 = vshll.u32 %v662, 16
        %v854 = vrot.slane %v852, 5
        %v855 = vsel %vm271, %v850, %v854
        %v856 = vshrl.u32 %v662, 16
        %v858 = vrot.slane %v856, 4
        %v859 = vor.u32 %v858, %v854
        %v860 = vrot.slane %v859, 4
        %v862 = vshll.u32 %v663, 16
        %v864 = vrot.slane %v862, 5
        %v865 = vsel %vm271, %v860, %v864
        %v867 = vshrl.u32 %v664, 16
        %v869 = vrot.slane %v867, 4
        %v870 = vshll.u32 %v664, 16
        %v872 = vrot.slane %v870, 5
        %v873 = vor.u32 %v869, %v872
        %v874 = vrot.slane %v873, 4
        %v876 = vshll.u32 %v665, 16
        %v878 = vrot.slane %v876, 5
        %v879 = vsel %vm271, %v874, %v878
        %v880 = vshrl.u32 %v665, 16
        %v882 = vrot.slane %v880, 4
        %v883 = vor.u32 %v882, %v878
        %v884 = vrot.slane %v883, 4
        %v886 = vshll.u32 %v666, 16
        %v888 = vrot.slane %v886, 5
        %v889 = vsel %vm271, %v884, %v888
        %v891 = vshrl.u32 %v667, 16
        %v893 = vrot.slane %v891, 4
        %v894 = vshll.u32 %v667, 16
        %v896 = vrot.slane %v894, 5
        %v897 = vor.u32 %v893, %v896
        %v898 = vrot.slane %v897, 4
        %v900 = vshll.u32 %v668, 16
        %v902 = vrot.slane %v900, 5
        %v903 = vsel %vm271, %v898, %v902
        %v904 = vshrl.u32 %v668, 16
        %v906 = vrot.slane %v904, 4
        %v907 = vor.u32 %v906, %v902
        %v908 = vrot.slane %v907, 4
        %v910 = vshll.u32 %v669, 16
        %v912 = vrot.slane %v910, 5
        %v913 = vsel %vm271, %v908, %v912
        %v915 = vshrl.u32 %v670, 16
        %v917 = vrot.slane %v915, 4
        %v918 = vshll.u32 %v670, 16
        %v920 = vrot.slane %v918, 5
        %v921 = vor.u32 %v917, %v920
        %v922 = vrot.slane %v921, 4
        %v924 = vshll.u32 %v671, 16
        %v926 = vrot.slane %v924, 5
        %v927 = vsel %vm271, %v922, %v926
        %v928 = vshrl.u32 %v671, 16
        %v930 = vrot.slane %v928, 4
        %v931 = vor.u32 %v930, %v926
        %v932 = vrot.slane %v931, 4
        %v934 = vshll.u32 %v672, 16
        %v936 = vrot.slane %v934, 5
        %v937 = vsel %vm271, %v932, %v936
        %v938 = vunpack.c.l.b16 %v759
        %v939 = vunpack.c.l.b16 %v769
        %v940 = vunpack.c.l.b16 %v783
        %v941 = vunpack.c.l.b16 %v793
        %v942 = vunpack.c.l.b16 %v807
        %v943 = vunpack.c.l.b16 %v817
        %v944 = vunpack.c.l.b16 %v831
        %v945 = vunpack.c.l.b16 %v841
        %v946 = vunpack.c.l.b16 %v855
        %v947 = vunpack.c.l.b16 %v865
        %v948 = vunpack.c.l.b16 %v879
        %v949 = vunpack.c.l.b16 %v889
        %v950 = vunpack.c.l.b16 %v903
        %v951 = vunpack.c.l.b16 %v913
        %v952 = vunpack.c.l.b16 %v927
        %v953 = vunpack.c.l.b16 %v937
        %v954 = vpack.c.b16 %v939, %v938
        %v955 = vpack.c.b16 %v941, %v940
        %v956 = vpack.c.b16 %v943, %v942
        %v957 = vpack.c.b16 %v945, %v944
        %v958 = vpack.c.b16 %v947, %v946
        %v959 = vpack.c.b16 %v949, %v948
        %v960 = vpack.c.b16 %v951, %v950
        %v961 = vpack.c.b16 %v953, %v952
        %962 = vrot.lane.b32.xlu0 %v954, 16
        %v963 = vpop.permute.xlu0 %962
        %964 = vrot.lane.b32.xlu0 %v955, 16
        %v965 = vpop.permute.xlu0 %964
        %966 = vrot.lane.b32.xlu0 %v956, 16
        %v967 = vpop.permute.xlu0 %966
        %968 = vrot.lane.b32.xlu0 %v957, 16
        %v969 = vpop.permute.xlu0 %968
        %970 = vrot.lane.b32.xlu0 %v958, 16
        %v971 = vpop.permute.xlu0 %970
        %972 = vrot.lane.b32.xlu0 %v959, 16
        %v973 = vpop.permute.xlu0 %972
        %974 = vrot.lane.b32.xlu0 %v960, 16
        %v975 = vpop.permute.xlu0 %974
        %976 = vrot.lane.b32.xlu0 %v961, 16
        %v977 = vpop.permute.xlu0 %976
        %vm986 = vcmask 162944
        %987 = vst.msk [vmem:[#allocation2] sm:$0xff] %vm986, %v963
        %988 = vst.msk [vmem:[#allocation2 + $0x8] sm:$0xff] %vm986, %v965
        %989 = vst.msk [vmem:[#allocation2 + $0x10] sm:$0xff] %vm986, %v967
        %990 = vst.msk [vmem:[#allocation2 + $0x18] sm:$0xff] %vm986, %v969
        %991 = vst.msk [vmem:[#allocation2 + $0x20] sm:$0xff] %vm986, %v971
        %992 = vst.msk [vmem:[#allocation2 + $0x28] sm:$0xff] %vm986, %v973
        %993 = vst.msk [vmem:[#allocation2 + $0x30] sm:$0xff] %vm986, %v975
        %994 = vst.msk [vmem:[#allocation2 + $0x38] sm:$0xff] %vm986, %v977
        %v1003 = vrot.slane %v649, 5
        %v1004 = vrot.slane %v1003, 4
        %v1005 = vrot.slane %v650, 5
        %v1006 = vsel %vm531, %v1004, %v1005
        %v1007 = vrot.slane %v1005, 4
        %v1008 = vrot.slane %v651, 5
        %v1009 = vsel %vm531, %v1007, %v1008
        %v1010 = vrot.slane %v652, 5
        %v1011 = vrot.slane %v1010, 4
        %v1012 = vrot.slane %v653, 5
        %v1013 = vsel %vm531, %v1011, %v1012
        %v1014 = vrot.slane %v1012, 4
        %v1015 = vrot.slane %v654, 5
        %v1016 = vsel %vm531, %v1014, %v1015
        %v1017 = vrot.slane %v655, 5
        %v1018 = vrot.slane %v1017, 4
        %v1019 = vrot.slane %v656, 5
        %v1020 = vsel %vm531, %v1018, %v1019
        %v1021 = vrot.slane %v1019, 4
        %v1022 = vrot.slane %v657, 5
        %v1023 = vsel %vm531, %v1021, %v1022
        %v1024 = vrot.slane %v658, 5
        %v1025 = vrot.slane %v1024, 4
        %v1026 = vrot.slane %v659, 5
        %v1027 = vsel %vm531, %v1025, %v1026
        %v1028 = vrot.slane %v1026, 4
        %v1029 = vrot.slane %v660, 5
        %v1030 = vsel %vm531, %v1028, %v1029
        %v1031 = vrot.slane %v661, 5
        %v1032 = vrot.slane %v1031, 4
        %v1033 = vrot.slane %v662, 5
        %v1034 = vsel %vm531, %v1032, %v1033
        %v1035 = vrot.slane %v1033, 4
        %v1036 = vrot.slane %v663, 5
        %v1037 = vsel %vm531, %v1035, %v1036
        %v1038 = vrot.slane %v664, 5
        %v1039 = vrot.slane %v1038, 4
        %v1040 = vrot.slane %v665, 5
        %v1041 = vsel %vm531, %v1039, %v1040
        %v1042 = vrot.slane %v1040, 4
        %v1043 = vrot.slane %v666, 5
        %v1044 = vsel %vm531, %v1042, %v1043
        %v1045 = vrot.slane %v667, 5
        %v1046 = vrot.slane %v1045, 4
        %v1047 = vrot.slane %v668, 5
        %v1048 = vsel %vm531, %v1046, %v1047
        %v1049 = vrot.slane %v1047, 4
        %v1050 = vrot.slane %v669, 5
        %v1051 = vsel %vm531, %v1049, %v1050
        %v1052 = vrot.slane %v670, 5
        %v1053 = vrot.slane %v1052, 4
        %v1054 = vrot.slane %v671, 5
        %v1055 = vsel %vm531, %v1053, %v1054
        %v1056 = vrot.slane %v1054, 4
        %v1057 = vrot.slane %v672, 5
        %v1058 = vsel %vm531, %v1056, %v1057
        %v1059 = vunpack.c.l.b16 %v1006
        %v1060 = vunpack.c.l.b16 %v1009
        %v1061 = vunpack.c.l.b16 %v1013
        %v1062 = vunpack.c.l.b16 %v1016
        %v1063 = vunpack.c.l.b16 %v1020
        %v1064 = vunpack.c.l.b16 %v1023
        %v1065 = vunpack.c.l.b16 %v1027
        %v1066 = vunpack.c.l.b16 %v1030
        %v1067 = vunpack.c.l.b16 %v1034
        %v1068 = vunpack.c.l.b16 %v1037
        %v1069 = vunpack.c.l.b16 %v1041
        %v1070 = vunpack.c.l.b16 %v1044
        %v1071 = vunpack.c.l.b16 %v1048
        %v1072 = vunpack.c.l.b16 %v1051
        %v1073 = vunpack.c.l.b16 %v1055
        %v1074 = vunpack.c.l.b16 %v1058
        %v1075 = vpack.c.b16 %v1060, %v1059
        %v1076 = vpack.c.b16 %v1062, %v1061
        %v1077 = vpack.c.b16 %v1064, %v1063
        %v1078 = vpack.c.b16 %v1066, %v1065
        %v1079 = vpack.c.b16 %v1068, %v1067
        %v1080 = vpack.c.b16 %v1070, %v1069
        %v1081 = vpack.c.b16 %v1072, %v1071
        %v1082 = vpack.c.b16 %v1074, %v1073
        %1083 = vrot.lane.b32.xlu0 %v1075, 20
        %v1084 = vpop.permute.xlu0 %1083
        %1085 = vrot.lane.b32.xlu0 %v1076, 20
        %v1086 = vpop.permute.xlu0 %1085
        %1087 = vrot.lane.b32.xlu0 %v1077, 20
        %v1088 = vpop.permute.xlu0 %1087
        %1089 = vrot.lane.b32.xlu0 %v1078, 20
        %v1090 = vpop.permute.xlu0 %1089
        %1091 = vrot.lane.b32.xlu0 %v1079, 20
        %v1092 = vpop.permute.xlu0 %1091
        %1093 = vrot.lane.b32.xlu0 %v1080, 20
        %v1094 = vpop.permute.xlu0 %1093
        %1095 = vrot.lane.b32.xlu0 %v1081, 20
        %v1096 = vpop.permute.xlu0 %1095
        %1097 = vrot.lane.b32.xlu0 %v1082, 20
        %v1098 = vpop.permute.xlu0 %1097
        %vm1107 = vcmask 195744
        %1108 = vst.msk [vmem:[#allocation2] sm:$0xff] %vm1107, %v1084
        %1109 = vst.msk [vmem:[#allocation2 + $0x8] sm:$0xff] %vm1107, %v1086
        %1110 = vst.msk [vmem:[#allocation2 + $0x10] sm:$0xff] %vm1107, %v1088
        %1111 = vst.msk [vmem:[#allocation2 + $0x18] sm:$0xff] %vm1107, %v1090
        %1112 = vst.msk [vmem:[#allocation2 + $0x20] sm:$0xff] %vm1107, %v1092
        %1113 = vst.msk [vmem:[#allocation2 + $0x28] sm:$0xff] %vm1107, %v1094
        %1114 = vst.msk [vmem:[#allocation2 + $0x30] sm:$0xff] %vm1107, %v1096
        %1115 = vst.msk [vmem:[#allocation2 + $0x38] sm:$0xff] %vm1107, %v1098
        %s1116 = sadd.s32 %s184, 2
        %s1117 = smul.u32 %s1116, 3
        %s1118 = smul.addr %s1117, 4
        %s1119 = scalar_lea.vmem %s182, %s1118
        %v1120 = vld [vmem:[%s1119] sm:$0xf]
        %v1121 = vld [vmem:[%s1119 + $0x4] sm:$0xf]
        %v1122 = vld [vmem:[%s1119 + $0x8] sm:$0x1]
        %v1123 = vld [vmem:[%s1119 + $0xc] sm:$0xf]
        %v1124 = vld [vmem:[%s1119 + $0x10] sm:$0xf]
        %v1125 = vld [vmem:[%s1119 + $0x14] sm:$0x1]
        %v1126 = vld [vmem:[%s1119 + $0x18] sm:$0xf]
        %v1127 = vld [vmem:[%s1119 + $0x1c] sm:$0xf]
        %v1128 = vld [vmem:[%s1119 + $0x20] sm:$0x1]
        %v1129 = vld [vmem:[%s1119 + $0x24] sm:$0xf]
        %v1130 = vld [vmem:[%s1119 + $0x28] sm:$0xf]
        %v1131 = vld [vmem:[%s1119 + $0x2c] sm:$0x1]
        %v1132 = vld [vmem:[%s1119 + $0x30] sm:$0xf]
        %v1133 = vld [vmem:[%s1119 + $0x34] sm:$0xf]
        %v1134 = vld [vmem:[%s1119 + $0x38] sm:$0x1]
        %v1135 = vld [vmem:[%s1119 + $0x3c] sm:$0xf]
        %v1136 = vld [vmem:[%s1119 + $0x40] sm:$0xf]
        %v1137 = vld [vmem:[%s1119 + $0x44] sm:$0x1]
        %v1138 = vld [vmem:[%s1119 + $0x48] sm:$0xf]
        %v1139 = vld [vmem:[%s1119 + $0x4c] sm:$0xf]
        %v1140 = vld [vmem:[%s1119 + $0x50] sm:$0x1]
        %v1141 = vld [vmem:[%s1119 + $0x54] sm:$0xf]
        %v1142 = vld [vmem:[%s1119 + $0x58] sm:$0xf]
        %v1143 = vld [vmem:[%s1119 + $0x5c] sm:$0x1]
        %v1160 = vunpack.c.l.b16 %v1120
        %v1161 = vunpack.c.l.b16 %v1121
        %v1162 = vunpack.c.l.b16 %v1123
        %v1163 = vunpack.c.l.b16 %v1124
        %v1164 = vunpack.c.l.b16 %v1126
        %v1165 = vunpack.c.l.b16 %v1127
        %v1166 = vunpack.c.l.b16 %v1129
        %v1167 = vunpack.c.l.b16 %v1130
        %v1168 = vunpack.c.l.b16 %v1132
        %v1169 = vunpack.c.l.b16 %v1133
        %v1170 = vunpack.c.l.b16 %v1135
        %v1171 = vunpack.c.l.b16 %v1136
        %v1172 = vunpack.c.l.b16 %v1138
        %v1173 = vunpack.c.l.b16 %v1139
        %v1174 = vunpack.c.l.b16 %v1141
        %v1175 = vunpack.c.l.b16 %v1142
        %v1176 = vpack.c.b16 %v1161, %v1160
        %v1177 = vpack.c.b16 %v1163, %v1162
        %v1178 = vpack.c.b16 %v1165, %v1164
        %v1179 = vpack.c.b16 %v1167, %v1166
        %v1180 = vpack.c.b16 %v1169, %v1168
        %v1181 = vpack.c.b16 %v1171, %v1170
        %v1182 = vpack.c.b16 %v1173, %v1172
        %v1183 = vpack.c.b16 %v1175, %v1174
        %1184 = vrot.lane.b32.xlu0 %v1176, 24
        %v1185 = vpop.permute.xlu0 %1184
        %1186 = vrot.lane.b32.xlu0 %v1177, 24
        %v1187 = vpop.permute.xlu0 %1186
        %1188 = vrot.lane.b32.xlu0 %v1178, 24
        %v1189 = vpop.permute.xlu0 %1188
        %1190 = vrot.lane.b32.xlu0 %v1179, 24
        %v1191 = vpop.permute.xlu0 %1190
        %1192 = vrot.lane.b32.xlu0 %v1180, 24
        %v1193 = vpop.permute.xlu0 %1192
        %1194 = vrot.lane.b32.xlu0 %v1181, 24
        %v1195 = vpop.permute.xlu0 %1194
        %1196 = vrot.lane.b32.xlu0 %v1182, 24
        %v1197 = vpop.permute.xlu0 %1196
        %1198 = vrot.lane.b32.xlu0 %v1183, 24
        %v1199 = vpop.permute.xlu0 %1198
        %vm1208 = vcmask 228544
        %1209 = vst.msk [vmem:[#allocation2] sm:$0xff] %vm1208, %v1185
        %1210 = vst.msk [vmem:[#allocation2 + $0x8] sm:$0xff] %vm1208, %v1187
        %1211 = vst.msk [vmem:[#allocation2 + $0x10] sm:$0xff] %vm1208, %v1189
        %1212 = vst.msk [vmem:[#allocation2 + $0x18] sm:$0xff] %vm1208, %v1191
        %1213 = vst.msk [vmem:[#allocation2 + $0x20] sm:$0xff] %vm1208, %v1193
        %1214 = vst.msk [vmem:[#allocation2 + $0x28] sm:$0xff] %vm1208, %v1195
        %1215 = vst.msk [vmem:[#allocation2 + $0x30] sm:$0xff] %vm1208, %v1197
        %1216 = vst.msk [vmem:[#allocation2 + $0x38] sm:$0xff] %vm1208, %v1199
        %v1218 = vshrl.u32 %v1120, 16
        %v1220 = vrot.slane %v1218, 4
        %v1221 = vshll.u32 %v1120, 16
        %v1223 = vrot.slane %v1221, 5
        %v1224 = vor.u32 %v1220, %v1223
        %v1225 = vrot.slane %v1224, 4
        %v1227 = vshll.u32 %v1121, 16
        %v1229 = vrot.slane %v1227, 5
        %v1230 = vsel %vm271, %v1225, %v1229
        %v1231 = vshrl.u32 %v1121, 16
        %v1233 = vrot.slane %v1231, 4
        %v1234 = vor.u32 %v1233, %v1229
        %v1235 = vrot.slane %v1234, 4
        %v1237 = vshll.u32 %v1122, 16
        %v1239 = vrot.slane %v1237, 5
        %v1240 = vsel %vm271, %v1235, %v1239
        %v1242 = vshrl.u32 %v1123, 16
        %v1244 = vrot.slane %v1242, 4
        %v1245 = vshll.u32 %v1123, 16
        %v1247 = vrot.slane %v1245, 5
        %v1248 = vor.u32 %v1244, %v1247
        %v1249 = vrot.slane %v1248, 4
        %v1251 = vshll.u32 %v1124, 16
        %v1253 = vrot.slane %v1251, 5
        %v1254 = vsel %vm271, %v1249, %v1253
        %v1255 = vshrl.u32 %v1124, 16
        %v1257 = vrot.slane %v1255, 4
        %v1258 = vor.u32 %v1257, %v1253
        %v1259 = vrot.slane %v1258, 4
        %v1261 = vshll.u32 %v1125, 16
        %v1263 = vrot.slane %v1261, 5
        %v1264 = vsel %vm271, %v1259, %v1263
        %v1266 = vshrl.u32 %v1126, 16
        %v1268 = vrot.slane %v1266, 4
        %v1269 = vshll.u32 %v1126, 16
        %v1271 = vrot.slane %v1269, 5
        %v1272 = vor.u32 %v1268, %v1271
        %v1273 = vrot.slane %v1272, 4
        %v1275 = vshll.u32 %v1127, 16
        %v1277 = vrot.slane %v1275, 5
        %v1278 = vsel %vm271, %v1273, %v1277
        %v1279 = vshrl.u32 %v1127, 16
        %v1281 = vrot.slane %v1279, 4
        %v1282 = vor.u32 %v1281, %v1277
        %v1283 = vrot.slane %v1282, 4
        %v1285 = vshll.u32 %v1128, 16
        %v1287 = vrot.slane %v1285, 5
        %v1288 = vsel %vm271, %v1283, %v1287
        %v1290 = vshrl.u32 %v1129, 16
        %v1292 = vrot.slane %v1290, 4
        %v1293 = vshll.u32 %v1129, 16
        %v1295 = vrot.slane %v1293, 5
        %v1296 = vor.u32 %v1292, %v1295
        %v1297 = vrot.slane %v1296, 4
        %v1299 = vshll.u32 %v1130, 16
        %v1301 = vrot.slane %v1299, 5
        %v1302 = vsel %vm271, %v1297, %v1301
        %v1303 = vshrl.u32 %v1130, 16
        %v1305 = vrot.slane %v1303, 4
        %v1306 = vor.u32 %v1305, %v1301
        %v1307 = vrot.slane %v1306, 4
        %v1309 = vshll.u32 %v1131, 16
        %v1311 = vrot.slane %v1309, 5
        %v1312 = vsel %vm271, %v1307, %v1311
        %v1314 = vshrl.u32 %v1132, 16
        %v1316 = vrot.slane %v1314, 4
        %v1317 = vshll.u32 %v1132, 16
        %v1319 = vrot.slane %v1317, 5
        %v1320 = vor.u32 %v1316, %v1319
        %v1321 = vrot.slane %v1320, 4
        %v1323 = vshll.u32 %v1133, 16
        %v1325 = vrot.slane %v1323, 5
        %v1326 = vsel %vm271, %v1321, %v1325
        %v1327 = vshrl.u32 %v1133, 16
        %v1329 = vrot.slane %v1327, 4
        %v1330 = vor.u32 %v1329, %v1325
        %v1331 = vrot.slane %v1330, 4
        %v1333 = vshll.u32 %v1134, 16
        %v1335 = vrot.slane %v1333, 5
        %v1336 = vsel %vm271, %v1331, %v1335
        %v1338 = vshrl.u32 %v1135, 16
        %v1340 = vrot.slane %v1338, 4
        %v1341 = vshll.u32 %v1135, 16
        %v1343 = vrot.slane %v1341, 5
        %v1344 = vor.u32 %v1340, %v1343
        %v1345 = vrot.slane %v1344, 4
        %v1347 = vshll.u32 %v1136, 16
        %v1349 = vrot.slane %v1347, 5
        %v1350 = vsel %vm271, %v1345, %v1349
        %v1351 = vshrl.u32 %v1136, 16
        %v1353 = vrot.slane %v1351, 4
        %v1354 = vor.u32 %v1353, %v1349
        %v1355 = vrot.slane %v1354, 4
        %v1357 = vshll.u32 %v1137, 16
        %v1359 = vrot.slane %v1357, 5
        %v1360 = vsel %vm271, %v1355, %v1359
        %v1362 = vshrl.u32 %v1138, 16
        %v1364 = vrot.slane %v1362, 4
        %v1365 = vshll.u32 %v1138, 16
        %v1367 = vrot.slane %v1365, 5
        %v1368 = vor.u32 %v1364, %v1367
        %v1369 = vrot.slane %v1368, 4
        %v1371 = vshll.u32 %v1139, 16
        %v1373 = vrot.slane %v1371, 5
        %v1374 = vsel %vm271, %v1369, %v1373
        %v1375 = vshrl.u32 %v1139, 16
        %v1377 = vrot.slane %v1375, 4
        %v1378 = vor.u32 %v1377, %v1373
        %v1379 = vrot.slane %v1378, 4
        %v1381 = vshll.u32 %v1140, 16
        %v1383 = vrot.slane %v1381, 5
        %v1384 = vsel %vm271, %v1379, %v1383
        %v1386 = vshrl.u32 %v1141, 16
        %v1388 = vrot.slane %v1386, 4
        %v1389 = vshll.u32 %v1141, 16
        %v1391 = vrot.slane %v1389, 5
        %v1392 = vor.u32 %v1388, %v1391
        %v1393 = vrot.slane %v1392, 4
        %v1395 = vshll.u32 %v1142, 16
        %v1397 = vrot.slane %v1395, 5
        %v1398 = vsel %vm271, %v1393, %v1397
        %v1399 = vshrl.u32 %v1142, 16
        %v1401 = vrot.slane %v1399, 4
        %v1402 = vor.u32 %v1401, %v1397
        %v1403 = vrot.slane %v1402, 4
        %v1405 = vshll.u32 %v1143, 16
        %v1407 = vrot.slane %v1405, 5
        %v1408 = vsel %vm271, %v1403, %v1407
        %v1409 = vunpack.c.l.b16 %v1230
        %v1410 = vunpack.c.l.b16 %v1240
        %v1411 = vunpack.c.l.b16 %v1254
        %v1412 = vunpack.c.l.b16 %v1264
        %v1413 = vunpack.c.l.b16 %v1278
        %v1414 = vunpack.c.l.b16 %v1288
        %v1415 = vunpack.c.l.b16 %v1302
        %v1416 = vunpack.c.l.b16 %v1312
        %v1417 = vunpack.c.l.b16 %v1326
        %v1418 = vunpack.c.l.b16 %v1336
        %v1419 = vunpack.c.l.b16 %v1350
        %v1420 = vunpack.c.l.b16 %v1360
        %v1421 = vunpack.c.l.b16 %v1374
        %v1422 = vunpack.c.l.b16 %v1384
        %v1423 = vunpack.c.l.b16 %v1398
        %v1424 = vunpack.c.l.b16 %v1408
        %v1425 = vpack.c.b16 %v1410, %v1409
        %v1426 = vpack.c.b16 %v1412, %v1411
        %v1427 = vpack.c.b16 %v1414, %v1413
        %v1428 = vpack.c.b16 %v1416, %v1415
        %v1429 = vpack.c.b16 %v1418, %v1417
        %v1430 = vpack.c.b16 %v1420, %v1419
        %v1431 = vpack.c.b16 %v1422, %v1421
        %v1432 = vpack.c.b16 %v1424, %v1423
        %1433 = vrot.lane.b32.xlu0 %v1425, 28
        %v1434 = vpop.permute.xlu0 %1433
        %1435 = vrot.lane.b32.xlu0 %v1426, 28
        %v1436 = vpop.permute.xlu0 %1435
        %1437 = vrot.lane.b32.xlu0 %v1427, 28
        %v1438 = vpop.permute.xlu0 %1437
        %1439 = vrot.lane.b32.xlu0 %v1428, 28
        %v1440 = vpop.permute.xlu0 %1439
        %1441 = vrot.lane.b32.xlu0 %v1429, 28
        %v1442 = vpop.permute.xlu0 %1441
        %1443 = vrot.lane.b32.xlu0 %v1430, 28
        %v1444 = vpop.permute.xlu0 %1443
        %1445 = vrot.lane.b32.xlu0 %v1431, 28
        %v1446 = vpop.permute.xlu0 %1445
        %1447 = vrot.lane.b32.xlu0 %v1432, 28
        %v1448 = vpop.permute.xlu0 %1447
        %vm1457 = vcmask 261344
        %1458 = vst.msk [vmem:[#allocation2] sm:$0xff] %vm1457, %v1434
        %1459 = vst.msk [vmem:[#allocation2 + $0x8] sm:$0xff] %vm1457, %v1436
        %1460 = vst.msk [vmem:[#allocation2 + $0x10] sm:$0xff] %vm1457, %v1438
        %1461 = vst.msk [vmem:[#allocation2 + $0x18] sm:$0xff] %vm1457, %v1440
        %1462 = vst.msk [vmem:[#allocation2 + $0x20] sm:$0xff] %vm1457, %v1442
        %1463 = vst.msk [vmem:[#allocation2 + $0x28] sm:$0xff] %vm1457, %v1444
        %1464 = vst.msk [vmem:[#allocation2 + $0x30] sm:$0xff] %vm1457, %v1446
        %1465 = vst.msk [vmem:[#allocation2 + $0x38] sm:$0xff] %vm1457, %v1448
        %v1474 = vrot.slane %v1120, 5
        %v1475 = vrot.slane %v1474, 4
        %v1476 = vrot.slane %v1121, 5
        %v1477 = vsel %vm531, %v1475, %v1476
        %v1478 = vrot.slane %v1476, 4
        %v1479 = vrot.slane %v1122, 5
        %v1480 = vsel %vm531, %v1478, %v1479
        %v1481 = vrot.slane %v1123, 5
        %v1482 = vrot.slane %v1481, 4
        %v1483 = vrot.slane %v1124, 5
        %v1484 = vsel %vm531, %v1482, %v1483
        %v1485 = vrot.slane %v1483, 4
        %v1486 = vrot.slane %v1125, 5
        %v1487 = vsel %vm531, %v1485, %v1486
        %v1488 = vrot.slane %v1126, 5
        %v1489 = vrot.slane %v1488, 4
        %v1490 = vrot.slane %v1127, 5
        %v1491 = vsel %vm531, %v1489, %v1490
        %v1492 = vrot.slane %v1490, 4
        %v1493 = vrot.slane %v1128, 5
        %v1494 = vsel %vm531, %v1492, %v1493
        %v1495 = vrot.slane %v1129, 5
        %v1496 = vrot.slane %v1495, 4
        %v1497 = vrot.slane %v1130, 5
        %v1498 = vsel %vm531, %v1496, %v1497
        %v1499 = vrot.slane %v1497, 4
        %v1500 = vrot.slane %v1131, 5
        %v1501 = vsel %vm531, %v1499, %v1500
        %v1502 = vrot.slane %v1132, 5
        %v1503 = vrot.slane %v1502, 4
        %v1504 = vrot.slane %v1133, 5
        %v1505 = vsel %vm531, %v1503, %v1504
        %v1506 = vrot.slane %v1504, 4
        %v1507 = vrot.slane %v1134, 5
        %v1508 = vsel %vm531, %v1506, %v1507
        %v1509 = vrot.slane %v1135, 5
        %v1510 = vrot.slane %v1509, 4
        %v1511 = vrot.slane %v1136, 5
        %v1512 = vsel %vm531, %v1510, %v1511
        %v1513 = vrot.slane %v1511, 4
        %v1514 = vrot.slane %v1137, 5
        %v1515 = vsel %vm531, %v1513, %v1514
        %v1516 = vrot.slane %v1138, 5
        %v1517 = vrot.slane %v1516, 4
        %v1518 = vrot.slane %v1139, 5
        %v1519 = vsel %vm531, %v1517, %v1518
        %v1520 = vrot.slane %v1518, 4
        %v1521 = vrot.slane %v1140, 5
        %v1522 = vsel %vm531, %v1520, %v1521
        %v1523 = vrot.slane %v1141, 5
        %v1524 = vrot.slane %v1523, 4
        %v1525 = vrot.slane %v1142, 5
        %v1526 = vsel %vm531, %v1524, %v1525
        %v1527 = vrot.slane %v1525, 4
        %v1528 = vrot.slane %v1143, 5
        %v1529 = vsel %vm531, %v1527, %v1528
        %v1530 = vunpack.c.l.b16 %v1477
        %v1531 = vunpack.c.l.b16 %v1480
        %v1532 = vunpack.c.l.b16 %v1484
        %v1533 = vunpack.c.l.b16 %v1487
        %v1534 = vunpack.c.l.b16 %v1491
        %v1535 = vunpack.c.l.b16 %v1494
        %v1536 = vunpack.c.l.b16 %v1498
        %v1537 = vunpack.c.l.b16 %v1501
        %v1538 = vunpack.c.l.b16 %v1505
        %v1539 = vunpack.c.l.b16 %v1508
        %v1540 = vunpack.c.l.b16 %v1512
        %v1541 = vunpack.c.l.b16 %v1515
        %v1542 = vunpack.c.l.b16 %v1519
        %v1543 = vunpack.c.l.b16 %v1522
        %v1544 = vunpack.c.l.b16 %v1526
        %v1545 = vunpack.c.l.b16 %v1529
        %v1546 = vpack.c.b16 %v1531, %v1530
        %v1547 = vpack.c.b16 %v1533, %v1532
        %v1548 = vpack.c.b16 %v1535, %v1534
        %v1549 = vpack.c.b16 %v1537, %v1536
        %v1550 = vpack.c.b16 %v1539, %v1538
        %v1551 = vpack.c.b16 %v1541, %v1540
        %v1552 = vpack.c.b16 %v1543, %v1542
        %v1553 = vpack.c.b16 %v1545, %v1544
        %1554 = vrot.lane.b32.xlu0 %v1546, 32
        %v1555 = vpop.permute.xlu0 %1554
        %1556 = vrot.lane.b32.xlu0 %v1547, 32
        %v1557 = vpop.permute.xlu0 %1556
        %1558 = vrot.lane.b32.xlu0 %v1548, 32
        %v1559 = vpop.permute.xlu0 %1558
        %1560 = vrot.lane.b32.xlu0 %v1549, 32
        %v1561 = vpop.permute.xlu0 %1560
        %1562 = vrot.lane.b32.xlu0 %v1550, 32
        %v1563 = vpop.permute.xlu0 %1562
        %1564 = vrot.lane.b32.xlu0 %v1551, 32
        %v1565 = vpop.permute.xlu0 %1564
        %1566 = vrot.lane.b32.xlu0 %v1552, 32
        %v1567 = vpop.permute.xlu0 %1566
        %1568 = vrot.lane.b32.xlu0 %v1553, 32
        %v1569 = vpop.permute.xlu0 %1568
        %vm1578 = vcmask 294144
        %1579 = vst.msk [vmem:[#allocation2] sm:$0xff] %vm1578, %v1555
        %1580 = vst.msk [vmem:[#allocation2 + $0x8] sm:$0xff] %vm1578, %v1557
        %1581 = vst.msk [vmem:[#allocation2 + $0x10] sm:$0xff] %vm1578, %v1559
        %1582 = vst.msk [vmem:[#allocation2 + $0x18] sm:$0xff] %vm1578, %v1561
        %1583 = vst.msk [vmem:[#allocation2 + $0x20] sm:$0xff] %vm1578, %v1563
        %1584 = vst.msk [vmem:[#allocation2 + $0x28] sm:$0xff] %vm1578, %v1565
        %1585 = vst.msk [vmem:[#allocation2 + $0x30] sm:$0xff] %vm1578, %v1567
        %1586 = vst.msk [vmem:[#allocation2 + $0x38] sm:$0xff] %vm1578, %v1569
        %v1587 = vld [vmem:[%s1] sm:$0xf]
        %v1588 = vld [vmem:[#allocation2] sm:$0xff]
        %v1589 = vld [vmem:[#allocation2 + $0x8] sm:$0xff]
        %v1590 = vld [vmem:[#allocation2 + $0x10] sm:$0xff]
        %v1591 = vld [vmem:[#allocation2 + $0x18] sm:$0xff]
        %v1592 = vld [vmem:[#allocation2 + $0x20] sm:$0xff]
        %v1593 = vld [vmem:[#allocation2 + $0x28] sm:$0xff]
        %v1594 = vld [vmem:[#allocation2 + $0x30] sm:$0xff]
        %v1595 = vld [vmem:[#allocation2 + $0x38] sm:$0xff]
        %v1596 = vld [vmem:[%s2] sm:$0xff]
        %1598 = vset.pattern.permute.xlu0 0
        %1599 = vperm.xlu0 %1598, %v1596
        %v1600 = vpop.permute.xlu0 %1599
        %vm1602 = vcmask 293888
        %v1604 = vsel %vm1602, %v1587, 0
        %v1607 = vsel %vm1602, %v1588, 0
        %v1610 = vsel %vm1602, %v1589, 0
        %v1613 = vsel %vm1602, %v1590, 0
        %v1616 = vsel %vm1602, %v1591, 0
        %v1619 = vsel %vm1602, %v1592, 0
        %v1622 = vsel %vm1602, %v1593, 0
        %v1625 = vsel %vm1602, %v1594, 0
        %v1628 = vsel %vm1602, %v1595, 0
        %1630 = vmatprep.subr.bf16.mxu0 0
        %1631 = vmatpush1.bf16.xpose.msra.mxu0 %v1607
        %1632 = vmatprep.subr.bf16.mxu0 0
        %1633 = vmatpush1.bf16.xpose.msra.mxu0 %v1610
        %1634 = vmatprep.subr.bf16.mxu0 0
        %1635 = vmatpush1.bf16.xpose.msra.mxu0 %v1613
        %1636 = vmatprep.subr.bf16.mxu0 0
        %1637 = vmatpush1.bf16.xpose.msra.mxu0 %v1616
        %1638 = vmatprep.subr.bf16.mxu0 0
        %1639 = vmatpush1.bf16.xpose.msra.mxu0 %v1619
        %1640 = vmatprep.subr.bf16.mxu0 0
        %1641 = vmatpush1.bf16.xpose.msra.mxu0 %v1622
        %1642 = vmatprep.subr.bf16.mxu0 0
        %1643 = vmatpush1.bf16.xpose.msra.mxu0 %v1625
        %1644 = vmatprep.subr.bf16.mxu0 0
        %1645 = vmatpush1.bf16.xpose.msra.mxu0 %v1628
        %1646 = vmatprep.subr.bf16.mxu0 0
        %1647 = vmatpush1.bf16.xpose.msra.mxu0 0
        %1648 = vmatprep.subr.bf16.mxu0 0
        %1649 = vmatpush1.bf16.xpose.msra.mxu0 0
        %1650 = vmatprep.subr.bf16.mxu0 0
        %1651 = vmatpush1.bf16.xpose.msra.mxu0 0
        %1652 = vmatprep.subr.bf16.mxu0 0
        %1653 = vmatpush1.bf16.xpose.msra.mxu0 0
        %1654 = vmatprep.subr.bf16.mxu0 0
        %1655 = vmatpush1.bf16.xpose.msra.mxu0 0
        %1656 = vmatprep.subr.bf16.mxu0 0
        %1657 = vmatpush1.bf16.xpose.msra.mxu0 0
        %1658 = vmatprep.subr.bf16.mxu0 0
        %1659 = vmatpush1.bf16.xpose.msra.mxu0 0
        %1660 = vmatprep.subr.bf16.mxu0 0
        %1661 = vmatpush1.bf16.xpose.msra.mxu0 0
        %1662 = vmatprep.mubr.bf16.mxu0 0
        %1663 = vmatmul.mubr.bf16.gmra.mrb[0].mxu0 %v1604
        %v1664 = vpop.f32.mrb[0].mxu0
        %v1665 = vadd.f32 %v1600, %v1664
        %v1666 = vpop.f32.mrb[0].mxu0
        %v1667 = vpop.f32.mrb[0].mxu0
        %v1668 = vpop.f32.mrb[0].mxu0
        %1669 = vdwg.mxu0
        %1670 = vst [vmem:[%s177] sm:$0xf] %v1665
        %s1671 = sand.u32 %s107, 1
        %s1672 = scalar_lea.sflag [#allocation4], %s1671
        %s1673 = sand.u32 %s107, 1
        %s1674 = smul.addr %s1673, 4
        %s1675 = scalar_lea.vmem [#allocation3], %s1674
        // Predicated region
        $region33: #{tpu_custom_call.1} parent=31 // pred_check
          %p1676 = pneg %p117
        $region34: #{tpu_custom_call.1} parent=31 // pred_check_branch
          %1678 = sbr.rel (%p1676) target = $region36
        $region35: #{tpu_custom_call.1} parent=31 // pred_region
          %s1680 = ssub.s32 64, 64
          %1681 = vsyncadd %s1672, %s1680
          %s1682 = smul.addr %s21, 2
          %s1683 = sadd.s32 %s22, %s1682
          %s1684 = smul.addr %s1683, 64
          %s1685 = scalar_lea.hbm %s3, %s1684
          %s1687 = sshll.u32 %s1675, 4
          %s1688 = int_to_ptr.vmem [resolvable:$true] %s1687
          %1690 = dma.vmem_to_hbm [thread:$0]  %s1688, 64, %s1685, %s1672
        $region36: #{tpu_custom_call.1} parent=31 // pred_fallthru
          _
      $region32: #{tpu_custom_call.1} parent=5 // pred_fallthru
        _
      %p1691 = scmp.le.s32.totalorder 2, %s12
      // Predicated region
      $region37: #{tpu_custom_call.1} parent=5 // pred_check
        %p1692 = pneg %p1691
      $region38: #{tpu_custom_call.1} parent=5 // pred_check_branch
        %1694 = sbr.rel (%p1692) target = $region40
      $region39: #{tpu_custom_call.1} parent=5 // pred_region
        %s1695 = ssub.s32 %s12, 2
        // Predicated region
        $region41: #{tpu_custom_call.1} parent=39 // pred_check
          %p1696 = pneg %p123
        $region42: #{tpu_custom_call.1} parent=39 // pred_check_branch
          %1698 = sbr.rel (%p1696) target = $region44
        $region43: #{tpu_custom_call.1} parent=39 // pred_region
          %s1699 = sand.u32 %s108, 1
          %s1700 = scalar_lea.sflag [#allocation4], %s1699
          %s1701 = sand.u32 %s108, 1
          %s1702 = smul.addr %s1701, 4
          %s1703 = scalar_lea.vmem [#allocation3], %s1702
          %1704 = dma.done %s1700, 64
        $region44: #{tpu_custom_call.1} parent=39 // pred_fallthru
          _
      $region40: #{tpu_custom_call.1} parent=5 // pred_fallthru
        _
    $region6: #{tpu_custom_call.1} parent=1 // loop_footer
      %s16 = sadd.s32 1, %s12
    $region7: #{tpu_custom_call.1} parent=1 // loop_footer_branch
      %11 = sbr.rel target = $region3
    $region8: #{tpu_custom_call.1} parent=1 // loop_exit
      _
    %1705 = vsyncpa [#allocation4], 1
    %s1706 = scalar_lea.sflag [#allocation4], 1
    %1707 = vsyncpa %s1706, 1

</llo_original>
